<compile_context>
chip_gen: v5e
topology: v5e:2x2
jax: 0.10.0
libtpu: 0.0.40
codegen_flags: <defaults>
</compile_context>

<pallas_src>
import jax
import jax.numpy as jnp
from jax.experimental import pallas as pl
from jax.experimental.pallas import tpu as pltpu

# ----- MeLU MovieLens config (fc1_in_dim = 512 = 8 embeddings * 64) -----
NUM_RATE, NUM_GENRE, NUM_DIRECTOR, NUM_ACTOR = 6, 25, 2186, 8030
NUM_GENDER, NUM_AGE, NUM_OCCUPATION, NUM_ZIPCODE = 2, 7, 21, 3402
EMB_DIM = 64
X_DIM = 10246

# Lane-aligned (zero-padded) K extents for the multi-hot linear projections.
KG_PAD = 128          # genre    25   -> 128
KD_PAD = 2304         # director 2186 -> 2304 (18 * 128)
KA_PAD = 8192         # actor    8030 -> 8192 (64 * 128)
TK_ACTOR = 2048       # K-chunk of the dominant actor weight stream (4 pipelined chunks)


def _melu_kernel(xg_ref, xd_ref, xa_ref, rate_ref, user_ref,
                 wg_ref, wd_ref, wa_ref, out_ref, dir_ref, acc_ref):
    """Grid = (batch_tiles, actor_K_chunks).
       xg/xd/xa: (BT, K_pad) bf16 multi-hot segments (xa chunked along K).
       rate/user: (BT, 64) / (BT, 256) f32 pre-gathered embedding rows.
       w*: (K_pad, 65) bf16; column 0 is a ones column (row-sum), cols 1:65 = W^T.
       out: (BT, 512) f32 = [rate|genre|director|actor | gender|age|occupation|area].
       dir_ref: (BT, 64) f32 scratch; acc_ref: (BT, 65) f32 actor accumulator."""
    E = EMB_DIM
    k = pl.program_id(1)

    @pl.when(k == 0)
    def _first_chunk():
        # Reset the actor accumulator for this batch tile.
        acc_ref[...] = jnp.zeros_like(acc_ref)

        # Genre projection; the MXU emits the row-sum for free via the ones column.
        pg = jnp.dot(xg_ref[...], wg_ref[...], preferred_element_type=jnp.float32)
        genre = pg[:, 1:1 + E] / pg[:, 0:1]               # exact divide (DMA-bound kernel)

        # Director projection, stashed until the final paired 128-lane store.
        pd = jnp.dot(xd_ref[...], wd_ref[...], preferred_element_type=jnp.float32)
        dir_ref[...] = pd[:, 1:1 + E] / pd[:, 0:1]

        # 128-lane-aligned, unmasked stores: [rate|genre] and the whole user half.
        out_ref[:, 0:2 * E] = jnp.concatenate([rate_ref[...], genre], axis=1)
        out_ref[:, 4 * E:8 * E] = user_ref[...]

    # Actor projection: accumulate one K-chunk per grid step so the w_actor DMA
    # stream is double-buffered against this (and the k==0) compute.
    acc_ref[...] += jnp.dot(xa_ref[...], wa_ref[...], preferred_element_type=jnp.float32)

    @pl.when(k == pl.num_programs(1) - 1)
    def _last_chunk():
        acc = acc_ref[...]
        actor = acc[:, 1:1 + E] / acc[:, 0:1]
        # [director|actor] as one 128-lane-aligned unmasked store.
        out_ref[:, 2 * E:4 * E] = jnp.concatenate([dir_ref[...], actor], axis=1)


def forward(packed, x):
    """x: (B, 10246) float. Returns (item_emb (B,256), user_emb (B,256))."""
    x = x.astype(jnp.float32)
    B = x.shape[0]

    # ---- single-index embeddings: cheap XLA gathers in the wrapper (only ~5*B rows
    #      of the tables are needed; keeps the tables out of the kernel DMA). ----
    def field(col, n):
        # clip: avoid OOB gathers on malformed input (semantic guard vs. torch error).
        return jnp.clip(x[:, col].astype(jnp.int32), 0, n - 1)

    rate_rows = jnp.take(packed["rate"], field(0, NUM_RATE), axis=0, mode="clip")
    user_rows = jnp.concatenate([
        jnp.take(packed["gender"],     field(10242, NUM_GENDER),     axis=0, mode="clip"),
        jnp.take(packed["age"],        field(10243, NUM_AGE),        axis=0, mode="clip"),
        jnp.take(packed["occupation"], field(10244, NUM_OCCUPATION), axis=0, mode="clip"),
        jnp.take(packed["area"],       field(10245, NUM_ZIPCODE),    axis=0, mode="clip"),
    ], axis=1)                                                           # (B, 256) f32

    # ---- multi-hot segments: bf16 (exact for 0/1 values), zero-padded so every
    #      operand is lane-aligned and every matmul K is a multiple of 128. ----
    xg = jnp.pad(x[:, 1:26],       ((0, 0), (0, KG_PAD - NUM_GENRE))).astype(jnp.bfloat16)
    xd = jnp.pad(x[:, 26:2212],    ((0, 0), (0, KD_PAD - NUM_DIRECTOR))).astype(jnp.bfloat16)
    xa = jnp.pad(x[:, 2212:10242], ((0, 0), (0, KA_PAD - NUM_ACTOR))).astype(jnp.bfloat16)

    # Batch tiling: single tile for small B; two 8-row-aligned tiles once B >= 16 so
    # both v7x TensorCores get work and VMEM residency stays bounded at larger B.
    BT = B // 2 if (B >= 16 and B % 16 == 0) else B
    NB = B // BT
    KT = KA_PAD // TK_ACTOR

    out = pl.pallas_call(
        _melu_kernel,
        out_shape=jax.ShapeDtypeStruct((B, 8 * EMB_DIM), jnp.float32),
        grid_spec=pltpu.PrefetchScalarGridSpec(
            num_scalar_prefetch=0,
            grid=(NB, KT),
            in_specs=[
                pl.BlockSpec((BT, KG_PAD),            lambda b, k: (b, 0)),
                pl.BlockSpec((BT, KD_PAD),            lambda b, k: (b, 0)),
                pl.BlockSpec((BT, TK_ACTOR),          lambda b, k: (b, k)),
                pl.BlockSpec((BT, EMB_DIM),           lambda b, k: (b, 0)),
                pl.BlockSpec((BT, 4 * EMB_DIM),       lambda b, k: (b, 0)),
                pl.BlockSpec((KG_PAD, EMB_DIM + 1),   lambda b, k: (0, 0)),
                pl.BlockSpec((KD_PAD, EMB_DIM + 1),   lambda b, k: (0, 0)),
                pl.BlockSpec((TK_ACTOR, EMB_DIM + 1), lambda b, k: (k, 0)),
            ],
            out_specs=pl.BlockSpec((BT, 8 * EMB_DIM), lambda b, k: (b, 0)),
            scratch_shapes=[
                pltpu.VMEM((BT, EMB_DIM), jnp.float32),      # director stash
                pltpu.VMEM((BT, EMB_DIM + 1), jnp.float32),  # actor accumulator (sum|proj)
            ],
        ),
        compiler_params=pltpu.CompilerParams(
            dimension_semantics=("parallel", "arbitrary")),
    )(xg, xd, xa, rate_rows, user_rows,
      packed["w_genre"], packed["w_director"], packed["w_actor"])

    return out[:, :4 * EMB_DIM], out[:, 4 * EMB_DIM:]


def init_params(key):
    """Synthetic parameters matching the module's __init__ shapes (f32, like PyTorch).
    Linear (genre/director/actor) weights are stored transposed: (in_features, 64)."""
    keys = jax.random.split(key, 8)

    def emb_table(k, n):  # nn.Embedding default init: N(0, 1)
        return jax.random.normal(k, (n, EMB_DIM), jnp.float32)

    def linear_weight_t(k, n_in):  # nn.Linear(bias=False): U(-1/sqrt(in), 1/sqrt(in))
        bound = 1.0 / (n_in ** 0.5)
        return jax.random.uniform(k, (n_in, EMB_DIM), jnp.float32, -bound, bound)

    # fc1/fc2/linear_out exist in __init__ but are unused by forward() -> not materialized.
    return dict(
        rate=emb_table(keys[0], NUM_RATE),
        genre=linear_weight_t(keys[1], NUM_GENRE),
        director=linear_weight_t(keys[2], NUM_DIRECTOR),
        actor=linear_weight_t(keys[3], NUM_ACTOR),
        gender=emb_table(keys[4], NUM_GENDER),
        age=emb_table(keys[5], NUM_AGE),
        occupation=emb_table(keys[6], NUM_OCCUPATION),
        area=emb_table(keys[7], NUM_ZIPCODE),
    )


def pack_params(params):
    """One-time packing (NOT per call):
       * linear weights in bf16 (halves the dominant HBM stream), ones column at
         column 0 so the same MXU matmul emits the row-sum denominator for free,
         K zero-padded to the lane-aligned extent;
       * embedding tables kept in f32 (they are gathered in the wrapper)."""
    def pack_linear(w, k_pad):
        k = w.shape[0]
        ones = jnp.ones((k, 1), jnp.float32)
        packed = jnp.concatenate([ones, w], axis=1)            # (K, 65), sum col first
        packed = jnp.pad(packed, ((0, k_pad - k), (0, 0)))     # zero rows: no effect
        return packed.astype(jnp.bfloat16)

    return dict(
        w_genre=pack_linear(params["genre"], KG_PAD),
        w_director=pack_linear(params["director"], KD_PAD),
        w_actor=pack_linear(params["actor"], KA_PAD),
        rate=params["rate"], gender=params["gender"], age=params["age"],
        occupation=params["occupation"], area=params["area"],
    )


def reference_forward(params, x):
    """Pure-JAX reference mirroring the PyTorch f32 semantics."""
    x = x.astype(jnp.float32)
    rate_idx = x[:, 0].astype(jnp.int32)
    genre = x[:, 1:26]
    director = x[:, 26:2212]
    actor = x[:, 2212:10242]
    gender_idx = x[:, 10242].astype(jnp.int32)
    age_idx = x[:, 10243].astype(jnp.int32)
    occupation_idx = x[:, 10244].astype(jnp.int32)
    area_idx = x[:, 10245].astype(jnp.int32)

    rate_emb = params["rate"][rate_idx]
    genre_emb = genre @ params["genre"] / jnp.sum(genre, 1, keepdims=True)
    director_emb = director @ params["director"] / jnp.sum(director, 1, keepdims=True)
    actor_emb = actor @ params["actor"] / jnp.sum(actor, 1, keepdims=True)
    item_emb = jnp.concatenate([rate_emb, genre_emb, director_emb, actor_emb], axis=1)
    user_emb = jnp.concatenate(
        [params["gender"][gender_idx], params["age"][age_idx],
         params["occupation"][occupation_idx], params["area"][area_idx]], axis=1)
    return item_emb, user_emb


def make_example_x(key, batch=8):
    ks = jax.random.split(key, 8)
    rate = jax.random.randint(ks[0], (batch, 1), 0, NUM_RATE).astype(jnp.float32)
    genre = jax.random.bernoulli(ks[1], 0.3, (batch, NUM_GENRE)).astype(jnp.float32)
    genre = genre.at[:, 0].set(1.0)  # avoid zero row-sums (div-by-zero in torch too)
    director = jax.random.bernoulli(ks[2], 0.01, (batch, NUM_DIRECTOR)).astype(jnp.float32)
    director = director.at[:, 0].set(1.0)
    actor = jax.random.bernoulli(ks[3], 0.01, (batch, NUM_ACTOR)).astype(jnp.float32)
    actor = actor.at[:, 0].set(1.0)
    gender = jax.random.randint(ks[4], (batch, 1), 0, NUM_GENDER).astype(jnp.float32)
    age = jax.random.randint(ks[5], (batch, 1), 0, NUM_AGE).astype(jnp.float32)
    occ = jax.random.randint(ks[6], (batch, 1), 0, NUM_OCCUPATION).astype(jnp.float32)
    area = jax.random.randint(ks[7], (batch, 1), 0, NUM_ZIPCODE).astype(jnp.float32)
    x = jnp.concatenate([rate, genre, director, actor, gender, age, occ, area], axis=1)
    assert x.shape == (batch, X_DIM)
    return x


if __name__ == "__main__":
    key = jax.random.PRNGKey(0)
    pkey, xkey = jax.random.split(key)
    params = init_params(pkey)
    packed = pack_params(params)
    x = make_example_x(xkey, batch=8)

    fwd = jax.jit(forward)
    item_emb, user_emb = fwd(packed, x)
    jax.block_until_ready((item_emb, user_emb))

    ref_item, ref_user = reference_forward(params, x)
    assert item_emb.shape == (8, 4 * EMB_DIM) and user_emb.shape == (8, 4 * EMB_DIM)
    # bf16-stored linear weights vs the f32 reference: worst-case abs deviation is
    # max|w| * 2^-9 ≈ 4e-4 (genre), well inside 2e-3; 0/1 activations and the f32
    # row-sum/divide are exact.
    assert jnp.allclose(item_emb, ref_item, rtol=2e-3, atol=2e-3)
    # User embeddings are pure f32 gathers -> essentially exact.
    assert jnp.allclose(user_emb, ref_user, rtol=1e-6, atol=1e-6)

    print("KERNEL_OK")
</pallas_src>

<mosaic_0001>
module attributes {stable_mosaic.version = 11 : i64} {
  func.func @_melu_kernel(%arg0: i32, %arg1: i32, %arg2: memref<8x128xbf16, #tpu.memory_space<vmem>>, %arg3: memref<8x2304xbf16, #tpu.memory_space<vmem>>, %arg4: memref<8x2048xbf16, #tpu.memory_space<vmem>>, %arg5: memref<8x64xf32, #tpu.memory_space<vmem>>, %arg6: memref<8x256xf32, #tpu.memory_space<vmem>>, %arg7: memref<128x65xbf16, #tpu.memory_space<vmem>>, %arg8: memref<2304x65xbf16, #tpu.memory_space<vmem>>, %arg9: memref<2048x65xbf16, #tpu.memory_space<vmem>>, %arg10: memref<8x512xf32, #tpu.memory_space<vmem>>, %arg11: memref<8x64xf32, #tpu.memory_space<vmem>>, %arg12: memref<8x65xf32, #tpu.memory_space<vmem>>) attributes {dimension_semantics = [#tpu.dimension_semantics<parallel>, #tpu.dimension_semantics<arbitrary>], iteration_bounds = array<i64: 1, 4>, scalar_prefetch = 0 : i64, scratch_operands = 2 : i64, tpu.core_type = #tpu.core_type<tc>, window_params = [{transform_indices = @transform_0, window_bounds = array<i64: 8, 128>}, {transform_indices = @transform_1, window_bounds = array<i64: 8, 2304>}, {transform_indices = @transform_2, window_bounds = array<i64: 8, 2048>}, {transform_indices = @transform_3, window_bounds = array<i64: 8, 64>}, {transform_indices = @transform_4, window_bounds = array<i64: 8, 256>}, {pipeline_mode = #tpu.pipeline_mode<synchronous>, transform_indices = @transform_5, window_bounds = array<i64: 128, 65>}, {pipeline_mode = #tpu.pipeline_mode<synchronous>, transform_indices = @transform_6, window_bounds = array<i64: 2304, 65>}, {transform_indices = @transform_7, window_bounds = array<i64: 2048, 65>}, {transform_indices = @transform_8, window_bounds = array<i64: 8, 512>}]} {
    %c0_i32 = arith.constant 0 : i32
    %0 = arith.cmpi eq, %arg1, %c0_i32 : i32
    %1 = arith.extui %0 : i1 to i32
    %c0_i32_0 = arith.constant 0 : i32
    %2 = arith.cmpi ne, %1, %c0_i32_0 : i32
    scf.if %2 {
      %cst_9 = arith.constant 0.000000e+00 : f32
      %12 = vector.broadcast %cst_9 : f32 to vector<8x65xf32>
      %c0_10 = arith.constant 0 : index
      %c0_11 = arith.constant 0 : index
      %13 = vector.load %arg12[%c0_10, %c0_11] : memref<8x65xf32, #tpu.memory_space<vmem>>, vector<8x65xf32>
      tpu.vector_store %arg12[%c0_10, %c0_11], %12 {strides = array<i32>} : memref<8x65xf32, #tpu.memory_space<vmem>>, vector<8x65xf32>,
      %c0_12 = arith.constant 0 : index
      %c0_13 = arith.constant 0 : index
      %14 = vector.load %arg2[%c0_12, %c0_13] : memref<8x128xbf16, #tpu.memory_space<vmem>>, vector<8x128xbf16>
      %c0_14 = arith.constant 0 : index
      %c0_15 = arith.constant 0 : index
      %15 = vector.load %arg7[%c0_14, %c0_15] : memref<128x65xbf16, #tpu.memory_space<vmem>>, vector<128x65xbf16>
      %cst_16 = arith.constant dense<0.000000e+00> : vector<8x65xf32>
      %16 = tpu.matmul %14, %15, %cst_16 {dimension_numbers = #tpu.dot_dimension_numbers<[1], [0], [0], [1], [0, 0, 1, 1], [], []>} : vector<8x128xbf16>, vector<128x65xbf16>, vector<8x65xf32> -> vector<8x65xf32>
      %17 = vector.extract_strided_slice %16 {offsets = [0, 1], sizes = [8, 64], strides = [1, 1]} : vector<8x65xf32> to vector<8x64xf32>
      %18 = vector.extract_strided_slice %16 {offsets = [0, 0], sizes = [8, 1], strides = [1, 1]} : vector<8x65xf32> to vector<8x1xf32>
      %19 = vector.broadcast %18 : vector<8x1xf32> to vector<8x64xf32>
      %20 = arith.divf %17, %19 : vector<8x64xf32>
      %c0_17 = arith.constant 0 : index
      %c0_18 = arith.constant 0 : index
      %21 = vector.load %arg3[%c0_17, %c0_18] : memref<8x2304xbf16, #tpu.memory_space<vmem>>, vector<8x2304xbf16>
      %c0_19 = arith.constant 0 : index
      %c0_20 = arith.constant 0 : index
      %22 = vector.load %arg8[%c0_19, %c0_20] : memref<2304x65xbf16, #tpu.memory_space<vmem>>, vector<2304x65xbf16>
      %cst_21 = arith.constant dense<0.000000e+00> : vector<8x65xf32>
      %23 = tpu.matmul %21, %22, %cst_21 {dimension_numbers = #tpu.dot_dimension_numbers<[1], [0], [0], [1], [0, 0, 1, 1], [], []>} : vector<8x2304xbf16>, vector<2304x65xbf16>, vector<8x65xf32> -> vector<8x65xf32>
      %24 = vector.extract_strided_slice %23 {offsets = [0, 1], sizes = [8, 64], strides = [1, 1]} : vector<8x65xf32> to vector<8x64xf32>
      %25 = vector.extract_strided_slice %23 {offsets = [0, 0], sizes = [8, 1], strides = [1, 1]} : vector<8x65xf32> to vector<8x1xf32>
      %26 = vector.broadcast %25 : vector<8x1xf32> to vector<8x64xf32>
      %27 = arith.divf %24, %26 : vector<8x64xf32>
      %c0_22 = arith.constant 0 : index
      %c0_23 = arith.constant 0 : index
      %28 = vector.load %arg11[%c0_22, %c0_23] : memref<8x64xf32, #tpu.memory_space<vmem>>, vector<8x64xf32>
      tpu.vector_store %arg11[%c0_22, %c0_23], %27 {strides = array<i32>} : memref<8x64xf32, #tpu.memory_space<vmem>>, vector<8x64xf32>,
      %c0_24 = arith.constant 0 : index
      %c0_25 = arith.constant 0 : index
      %29 = vector.load %arg5[%c0_24, %c0_25] : memref<8x64xf32, #tpu.memory_space<vmem>>, vector<8x64xf32>
      %30 = tpu.concatenate %29, %20 in 1 : vector<8x64xf32>, vector<8x64xf32> -> vector<8x128xf32>
      %c0_26 = arith.constant 0 : index
      %c0_27 = arith.constant 0 : index
      %31 = vector.load %arg10[%c0_26, %c0_27] : memref<8x512xf32, #tpu.memory_space<vmem>>, vector<8x128xf32>
      tpu.vector_store %arg10[%c0_26, %c0_27], %30 {strides = array<i32>} : memref<8x512xf32, #tpu.memory_space<vmem>>, vector<8x128xf32>,
      %c0_28 = arith.constant 0 : index
      %c0_29 = arith.constant 0 : index
      %32 = vector.load %arg6[%c0_28, %c0_29] : memref<8x256xf32, #tpu.memory_space<vmem>>, vector<8x256xf32>
      %c0_30 = arith.constant 0 : index
      %c256 = arith.constant 256 : index
      %33 = vector.load %arg10[%c0_30, %c256] : memref<8x512xf32, #tpu.memory_space<vmem>>, vector<8x256xf32>
      tpu.vector_store %arg10[%c0_30, %c256], %32 {strides = array<i32>} : memref<8x512xf32, #tpu.memory_space<vmem>>, vector<8x256xf32>,
    } else {
    }
    %c0 = arith.constant 0 : index
    %c0_1 = arith.constant 0 : index
    %3 = vector.load %arg12[%c0, %c0_1] : memref<8x65xf32, #tpu.memory_space<vmem>>, vector<8x65xf32>
    %c0_2 = arith.constant 0 : index
    %c0_3 = arith.constant 0 : index
    %4 = vector.load %arg4[%c0_2, %c0_3] : memref<8x2048xbf16, #tpu.memory_space<vmem>>, vector<8x2048xbf16>
    %c0_4 = arith.constant 0 : index
    %c0_5 = arith.constant 0 : index
    %5 = vector.load %arg9[%c0_4, %c0_5] : memref<2048x65xbf16, #tpu.memory_space<vmem>>, vector<2048x65xbf16>
    %cst = arith.constant dense<0.000000e+00> : vector<8x65xf32>
    %6 = tpu.matmul %4, %5, %cst {dimension_numbers = #tpu.dot_dimension_numbers<[1], [0], [0], [1], [0, 0, 1, 1], [], []>} : vector<8x2048xbf16>, vector<2048x65xbf16>, vector<8x65xf32> -> vector<8x65xf32>
    %7 = arith.addf %3, %6 : vector<8x65xf32>
    %c0_6 = arith.constant 0 : index
    %c0_7 = arith.constant 0 : index
    %8 = vector.load %arg12[%c0_6, %c0_7] : memref<8x65xf32, #tpu.memory_space<vmem>>, vector<8x65xf32>
    tpu.vector_store %arg12[%c0_6, %c0_7], %7 {strides = array<i32>} : memref<8x65xf32, #tpu.memory_space<vmem>>, vector<8x65xf32>,
    %c3_i32 = arith.constant 3 : i32
    %9 = arith.cmpi eq, %arg1, %c3_i32 : i32
    %10 = arith.extui %9 : i1 to i32
    %c0_i32_8 = arith.constant 0 : i32
    %11 = arith.cmpi ne, %10, %c0_i32_8 : i32
    scf.if %11 {
      %c0_9 = arith.constant 0 : index
      %c0_10 = arith.constant 0 : index
      %12 = vector.load %arg12[%c0_9, %c0_10] : memref<8x65xf32, #tpu.memory_space<vmem>>, vector<8x65xf32>
      %13 = vector.extract_strided_slice %12 {offsets = [0, 1], sizes = [8, 64], strides = [1, 1]} : vector<8x65xf32> to vector<8x64xf32>
      %14 = vector.extract_strided_slice %12 {offsets = [0, 0], sizes = [8, 1], strides = [1, 1]} : vector<8x65xf32> to vector<8x1xf32>
      %15 = vector.broadcast %14 : vector<8x1xf32> to vector<8x64xf32>
      %16 = arith.divf %13, %15 : vector<8x64xf32>
      %c0_11 = arith.constant 0 : index
      %c0_12 = arith.constant 0 : index
      %17 = vector.load %arg11[%c0_11, %c0_12] : memref<8x64xf32, #tpu.memory_space<vmem>>, vector<8x64xf32>
      %18 = tpu.concatenate %17, %16 in 1 : vector<8x64xf32>, vector<8x64xf32> -> vector<8x128xf32>
      %c0_13 = arith.constant 0 : index
      %c128 = arith.constant 128 : index
      %19 = vector.load %arg10[%c0_13, %c128] : memref<8x512xf32, #tpu.memory_space<vmem>>, vector<8x128xf32>
      tpu.vector_store %arg10[%c0_13, %c128], %18 {strides = array<i32>} : memref<8x512xf32, #tpu.memory_space<vmem>>, vector<8x128xf32>,
    } else {
    }
    return
  }
  func.func @transform_0(%arg0: i32, %arg1: i32) -> (i32, i32) {
    %c0_i32 = arith.constant 0 : i32
    %c0_i32_0 = arith.constant 0 : i32
    return %arg0, %c0_i32 : i32, i32
  }
  func.func @transform_1(%arg0: i32, %arg1: i32) -> (i32, i32) {
    %c0_i32 = arith.constant 0 : i32
    %c0_i32_0 = arith.constant 0 : i32
    return %arg0, %c0_i32 : i32, i32
  }
  func.func @transform_2(%arg0: i32, %arg1: i32) -> (i32, i32) {
    %c0_i32 = arith.constant 0 : i32
    return %arg0, %arg1 : i32, i32
  }
  func.func @transform_3(%arg0: i32, %arg1: i32) -> (i32, i32) {
    %c0_i32 = arith.constant 0 : i32
    %c0_i32_0 = arith.constant 0 : i32
    return %arg0, %c0_i32 : i32, i32
  }
  func.func @transform_4(%arg0: i32, %arg1: i32) -> (i32, i32) {
    %c0_i32 = arith.constant 0 : i32
    %c0_i32_0 = arith.constant 0 : i32
    return %arg0, %c0_i32 : i32, i32
  }
  func.func @transform_5(%arg0: i32, %arg1: i32) -> (i32, i32) {
    %c0_i32 = arith.constant 0 : i32
    %c0_i32_0 = arith.constant 0 : i32
    %c0_i32_1 = arith.constant 0 : i32
    return %c0_i32, %c0_i32_0 : i32, i32
  }
  func.func @transform_6(%arg0: i32, %arg1: i32) -> (i32, i32) {
    %c0_i32 = arith.constant 0 : i32
    %c0_i32_0 = arith.constant 0 : i32
    %c0_i32_1 = arith.constant 0 : i32
    return %c0_i32, %c0_i32_0 : i32, i32
  }
  func.func @transform_7(%arg0: i32, %arg1: i32) -> (i32, i32) {
    %c0_i32 = arith.constant 0 : i32
    %c0_i32_0 = arith.constant 0 : i32
    return %arg1, %c0_i32 : i32, i32
  }
  func.func @transform_8(%arg0: i32, %arg1: i32) -> (i32, i32) {
    %c0_i32 = arith.constant 0 : i32
    %c0_i32_0 = arith.constant 0 : i32
    return %arg0, %c0_i32 : i32, i32
  }
}

</mosaic_0001>

<llo_original>
// kernel: forward.1
$region0: #{forward.1}
  #allocation0 [shape = 'u32[]', space=smem, size = 0x4, offset = 0x4, fixed_abs, tag = 'smem constant byte address 0x4 - core index']
  #allocation1 [shape = 'u32[72,128]{1,0:T(1,128)}', space=vmem, size = 0x9000, scoped, tag = 'internal scratch']
  #allocation2 [shape = 'f32[8,64]{1,0:T(8,128)}', space=vmem, size = 0x1000, scoped, tag = 'scratch operand']
  #allocation3 [shape = 'f32[8,65]{1,0:T(8,128)}', space=vmem, size = 0x1000, scoped, tag = 'scratch operand']
  %s0 = inlined_call_operand.vmem [shape: bf16[8,128], index: 0, kind: input, shape index: {}]
  %s1 = inlined_call_operand.vmem [shape: bf16[8,2304], index: 1, kind: input, shape index: {}]
  %s2 = inlined_call_operand.vmem [shape: bf16[8,8192], index: 2, kind: input, shape index: {}]
  %s3 = inlined_call_operand.vmem [shape: f32[8,64], index: 3, kind: input, shape index: {}]
  %s4 = inlined_call_operand.vmem [shape: f32[8,256], index: 4, kind: input, shape index: {}]
  %s5 = inlined_call_operand.vmem [shape: bf16[128,65], index: 5, kind: input, shape index: {}]
  %s6 = inlined_call_operand.vmem [shape: bf16[2304,65], index: 6, kind: input, shape index: {}]
  %s7 = inlined_call_operand.vmem [shape: bf16[8192,65], index: 7, kind: input, shape index: {}]
  %s8 = inlined_call_operand.vmem [shape: f32[8,512], index: 8, kind: output, shape index: {}]
  %s9 = sld [smem:[#allocation0]]
  $region73: #{forward.1} parent=0
    _
  %s11 = ssub.s32 1, %s9
  %s12 = scalar_select 0, %s11, %s9
  loop: start=0, step=1, limit=6
  $region2: #{forward.1} parent=0 // loop_pre_header
    _
  $region3: #{forward.1} parent=0 // loop_header
    %s14 = sphi 0, %s18
    %p15 = scmp.ge.s32.totalorder %s14, 6
    %s21 = sphi 0, %s33
    %s22 = sphi 0, %s29
    %s23 = sphi 0, %s21
    %s24 = sphi 0, %s22
    %s25 = sphi 0, %s23
    %s26 = sphi 0, %s24
    %s36 = sphi 0, %s38
    %s39 = sphi 0, %s36
    %s40 = sphi 0, %s39
    %s56 = sphi 0, %s40
    %s62 = sphi 0, %s64
    %s65 = sphi 0, %s62
    %s66 = sphi 0, %s65
    %s82 = sphi 0, %s66
    %s90 = sphi 0, %s92
    %s93 = sphi 0, %s90
    %s94 = sphi 0, %s93
    %s110 = sphi 0, %s94
    %s116 = sphi 0, %s118
    %s119 = sphi 0, %s116
    %s120 = sphi 0, %s119
    %s136 = sphi 0, %s120
    %s142 = sphi 0, %s144
    %s145 = sphi 0, %s142
    %s146 = sphi 0, %s145
    %s162 = sphi 0, %s146
    %s166 = sphi 0, %s166
    %s168 = sphi 0, %s166
    %s169 = sphi 0, %s168
    %s183 = sphi 0, %s169
    %s187 = sphi 0, %s187
    %s189 = sphi 0, %s187
    %s190 = sphi 0, %s189
    %s204 = sphi 0, %s190
    %s210 = sphi 0, %s212
    %s213 = sphi 0, %s210
    %s214 = sphi 0, %s213
    %s230 = sphi 0, %s214
    %s236 = sphi 0, %s238
    %s239 = sphi 0, %s236
    %s240 = sphi 0, %s239
    %s256 = sphi 0, %s240
  $region4: #{forward.1} parent=0 // loop_header_branch
    %17 = sbr.rel (%p15) target = $region8
  $region5: #{forward.1} parent=0 // loop_body
    %s19 = ssub.s32 %s14, 1
    %s20 = ssub.s32 %s14, 2
    %s27 = sadd.s32 1, %s22
    %p28 = scmp.ge.s32.totalorder %s27, 4
    %s29 = scalar_select %p28, 0, %s27
    %s30 = sadd.s32 1, %s21
    %s31 = scalar_select %p28, %s30, %s21
    %p32 = scmp.ge.s32.totalorder %s31, 1
    %s33 = scalar_select %p32, 0, %s31
    %s34 = ssub.s32 %s21, %s33
    %p35 = scmp.eq.s32.totalorder %s34, 0
    %s37 = sadd.s32 %s36, 1
    %s38 = scalar_select %p35, %s36, %s37
    %p41 = pneg %p35
    %p42 = scmp.eq.s32.totalorder %s14, 3
    %p43 = por %p41, %p42
    %p44 = scmp.ne.s32.totalorder %s36, %s39
    %p45 = scmp.eq.s32.totalorder %s14, 0
    %p46 = por %p44, %p45
    %p47 = scmp.ne.s32.totalorder %s36, %s39
    %p48 = scmp.eq.s32.totalorder %s19, 3
    %p49 = por %p47, %p48
    %p50 = scmp.ne.s32.totalorder %s39, %s40
    %p51 = scmp.eq.s32.totalorder %s19, 0
    %p52 = por %p50, %p51
    %p53 = scmp.ne.s32.totalorder %s39, %s40
    %p54 = scmp.eq.s32.totalorder %s20, 3
    %p55 = por %p53, %p54
    %p57 = scmp.ne.s32.totalorder %s40, %s56
    %p58 = scmp.eq.s32.totalorder %s20, 0
    %p59 = por %p57, %p58
    %s60 = ssub.s32 %s21, %s33
    %p61 = scmp.eq.s32.totalorder %s60, 0
    %s63 = sadd.s32 %s62, 1
    %s64 = scalar_select %p61, %s62, %s63
    %p67 = pneg %p61
    %p68 = scmp.eq.s32.totalorder %s14, 3
    %p69 = por %p67, %p68
    %p70 = scmp.ne.s32.totalorder %s62, %s65
    %p71 = scmp.eq.s32.totalorder %s14, 0
    %p72 = por %p70, %p71
    %p73 = scmp.ne.s32.totalorder %s62, %s65
    %p74 = scmp.eq.s32.totalorder %s19, 3
    %p75 = por %p73, %p74
    %p76 = scmp.ne.s32.totalorder %s65, %s66
    %p77 = scmp.eq.s32.totalorder %s19, 0
    %p78 = por %p76, %p77
    %p79 = scmp.ne.s32.totalorder %s65, %s66
    %p80 = scmp.eq.s32.totalorder %s20, 3
    %p81 = por %p79, %p80
    %p83 = scmp.ne.s32.totalorder %s66, %s82
    %p84 = scmp.eq.s32.totalorder %s20, 0
    %p85 = por %p83, %p84
    %s86 = ssub.s32 %s21, %s33
    %s87 = ssub.s32 %s22, %s29
    %s88 = sor.u32 %s86, %s87
    %p89 = scmp.eq.s32.totalorder %s88, 0
    %s91 = sadd.s32 %s90, 1
    %s92 = scalar_select %p89, %s90, %s91
    %p95 = pneg %p89
    %p96 = scmp.eq.s32.totalorder %s14, 3
    %p97 = por %p95, %p96
    %p98 = scmp.ne.s32.totalorder %s90, %s93
    %p99 = scmp.eq.s32.totalorder %s14, 0
    %p100 = por %p98, %p99
    %p101 = scmp.ne.s32.totalorder %s90, %s93
    %p102 = scmp.eq.s32.totalorder %s19, 3
    %p103 = por %p101, %p102
    %p104 = scmp.ne.s32.totalorder %s93, %s94
    %p105 = scmp.eq.s32.totalorder %s19, 0
    %p106 = por %p104, %p105
    %p107 = scmp.ne.s32.totalorder %s93, %s94
    %p108 = scmp.eq.s32.totalorder %s20, 3
    %p109 = por %p107, %p108
    %p111 = scmp.ne.s32.totalorder %s94, %s110
    %p112 = scmp.eq.s32.totalorder %s20, 0
    %p113 = por %p111, %p112
    %s114 = ssub.s32 %s21, %s33
    %p115 = scmp.eq.s32.totalorder %s114, 0
    %s117 = sadd.s32 %s116, 1
    %s118 = scalar_select %p115, %s116, %s117
    %p121 = pneg %p115
    %p122 = scmp.eq.s32.totalorder %s14, 3
    %p123 = por %p121, %p122
    %p124 = scmp.ne.s32.totalorder %s116, %s119
    %p125 = scmp.eq.s32.totalorder %s14, 0
    %p126 = por %p124, %p125
    %p127 = scmp.ne.s32.totalorder %s116, %s119
    %p128 = scmp.eq.s32.totalorder %s19, 3
    %p129 = por %p127, %p128
    %p130 = scmp.ne.s32.totalorder %s119, %s120
    %p131 = scmp.eq.s32.totalorder %s19, 0
    %p132 = por %p130, %p131
    %p133 = scmp.ne.s32.totalorder %s119, %s120
    %p134 = scmp.eq.s32.totalorder %s20, 3
    %p135 = por %p133, %p134
    %p137 = scmp.ne.s32.totalorder %s120, %s136
    %p138 = scmp.eq.s32.totalorder %s20, 0
    %p139 = por %p137, %p138
    %s140 = ssub.s32 %s21, %s33
    %p141 = scmp.eq.s32.totalorder %s140, 0
    %s143 = sadd.s32 %s142, 1
    %s144 = scalar_select %p141, %s142, %s143
    %p147 = pneg %p141
    %p148 = scmp.eq.s32.totalorder %s14, 3
    %p149 = por %p147, %p148
    %p150 = scmp.ne.s32.totalorder %s142, %s145
    %p151 = scmp.eq.s32.totalorder %s14, 0
    %p152 = por %p150, %p151
    %p153 = scmp.ne.s32.totalorder %s142, %s145
    %p154 = scmp.eq.s32.totalorder %s19, 3
    %p155 = por %p153, %p154
    %p156 = scmp.ne.s32.totalorder %s145, %s146
    %p157 = scmp.eq.s32.totalorder %s19, 0
    %p158 = por %p156, %p157
    %p159 = scmp.ne.s32.totalorder %s145, %s146
    %p160 = scmp.eq.s32.totalorder %s20, 3
    %p161 = por %p159, %p160
    %p163 = scmp.ne.s32.totalorder %s146, %s162
    %p164 = scmp.eq.s32.totalorder %s20, 0
    %p165 = por %p163, %p164
    %s167 = sadd.s32 %s166, 1
    %p170 = scmp.eq.s32.totalorder %s14, 3
    %p171 = scmp.ne.s32.totalorder %s166, %s168
    %p172 = scmp.eq.s32.totalorder %s14, 0
    %p173 = por %p171, %p172
    %p174 = scmp.ne.s32.totalorder %s166, %s168
    %p175 = scmp.eq.s32.totalorder %s19, 3
    %p176 = por %p174, %p175
    %p177 = scmp.ne.s32.totalorder %s168, %s169
    %p178 = scmp.eq.s32.totalorder %s19, 0
    %p179 = por %p177, %p178
    %p180 = scmp.ne.s32.totalorder %s168, %s169
    %p181 = scmp.eq.s32.totalorder %s20, 3
    %p182 = por %p180, %p181
    %p184 = scmp.ne.s32.totalorder %s169, %s183
    %p185 = scmp.eq.s32.totalorder %s20, 0
    %p186 = por %p184, %p185
    %s188 = sadd.s32 %s187, 1
    %p191 = scmp.eq.s32.totalorder %s14, 3
    %p192 = scmp.ne.s32.totalorder %s187, %s189
    %p193 = scmp.eq.s32.totalorder %s14, 0
    %p194 = por %p192, %p193
    %p195 = scmp.ne.s32.totalorder %s187, %s189
    %p196 = scmp.eq.s32.totalorder %s19, 3
    %p197 = por %p195, %p196
    %p198 = scmp.ne.s32.totalorder %s189, %s190
    %p199 = scmp.eq.s32.totalorder %s19, 0
    %p200 = por %p198, %p199
    %p201 = scmp.ne.s32.totalorder %s189, %s190
    %p202 = scmp.eq.s32.totalorder %s20, 3
    %p203 = por %p201, %p202
    %p205 = scmp.ne.s32.totalorder %s190, %s204
    %p206 = scmp.eq.s32.totalorder %s20, 0
    %p207 = por %p205, %p206
    %s208 = ssub.s32 %s22, %s29
    %p209 = scmp.eq.s32.totalorder %s208, 0
    %s211 = sadd.s32 %s210, 1
    %s212 = scalar_select %p209, %s210, %s211
    %p215 = pneg %p209
    %p216 = scmp.eq.s32.totalorder %s14, 3
    %p217 = por %p215, %p216
    %p218 = scmp.ne.s32.totalorder %s210, %s213
    %p219 = scmp.eq.s32.totalorder %s14, 0
    %p220 = por %p218, %p219
    %p221 = scmp.ne.s32.totalorder %s210, %s213
    %p222 = scmp.eq.s32.totalorder %s19, 3
    %p223 = por %p221, %p222
    %p224 = scmp.ne.s32.totalorder %s213, %s214
    %p225 = scmp.eq.s32.totalorder %s19, 0
    %p226 = por %p224, %p225
    %p227 = scmp.ne.s32.totalorder %s213, %s214
    %p228 = scmp.eq.s32.totalorder %s20, 3
    %p229 = por %p227, %p228
    %p231 = scmp.ne.s32.totalorder %s214, %s230
    %p232 = scmp.eq.s32.totalorder %s20, 0
    %p233 = por %p231, %p232
    %s234 = ssub.s32 %s21, %s33
    %p235 = scmp.eq.s32.totalorder %s234, 0
    %s237 = sadd.s32 %s236, 1
    %s238 = scalar_select %p235, %s236, %s237
    %p241 = pneg %p235
    %p242 = scmp.eq.s32.totalorder %s14, 3
    %p243 = por %p241, %p242
    %p244 = scmp.ne.s32.totalorder %s236, %s239
    %p245 = scmp.eq.s32.totalorder %s14, 0
    %p246 = por %p244, %p245
    %p247 = scmp.ne.s32.totalorder %s236, %s239
    %p248 = scmp.eq.s32.totalorder %s19, 3
    %p249 = por %p247, %p248
    %p250 = scmp.ne.s32.totalorder %s239, %s240
    %p251 = scmp.eq.s32.totalorder %s19, 0
    %p252 = por %p250, %p251
    %p253 = scmp.ne.s32.totalorder %s239, %s240
    %p254 = scmp.eq.s32.totalorder %s20, 3
    %p255 = por %p253, %p254
    %p257 = scmp.ne.s32.totalorder %s240, %s256
    %p258 = scmp.eq.s32.totalorder %s20, 0
    %p259 = por %p257, %p258
    %p260 = scmp.le.s32.totalorder 1, %s14
    %p261 = scmp.lt.s32.totalorder %s14, 5
    %p262 = pnand %p260, %p261
    %p263 = pneg %p262
    // Predicated region
    $region9: #{forward.1} parent=5 // pred_check
      _
    $region10: #{forward.1} parent=5 // pred_check_branch
      %265 = sbr.rel (%p262) target = $region12
    $region11: #{forward.1} parent=5 // pred_region
      %s266 = ssub.s32 %s14, 1
      // Predicated region
      $region13: #{forward.1} parent=11 // pred_check
        %p267 = pneg %p52
      $region14: #{forward.1} parent=11 // pred_check_branch
        %269 = sbr.rel (%p267) target = $region16
      $region15: #{forward.1} parent=11 // pred_region
        %p270 = scmp.lt.s32.totalorder %s23, 0
        %s271 = scalar_select %p270, %s23, 0
        %s272 = smul.addr %s271, 4
        %s273 = scalar_lea.vmem %s0, %s272
      $region16: #{forward.1} parent=11 // pred_fallthru
        _
      // Predicated region
      $region17: #{forward.1} parent=11 // pred_check
        %p274 = pneg %p78
      $region18: #{forward.1} parent=11 // pred_check_branch
        %276 = sbr.rel (%p274) target = $region20
      $region19: #{forward.1} parent=11 // pred_region
        %p277 = scmp.lt.s32.totalorder %s23, 0
        %s278 = scalar_select %p277, %s23, 0
        %s279 = smul.addr %s278, 18
        %s280 = smul.addr %s279, 4
        %s281 = scalar_lea.vmem %s1, %s280
      $region20: #{forward.1} parent=11 // pred_fallthru
        _
      // Predicated region
      $region21: #{forward.1} parent=11 // pred_check
        %p282 = pneg %p132
      $region22: #{forward.1} parent=11 // pred_check_branch
        %284 = sbr.rel (%p282) target = $region24
      $region23: #{forward.1} parent=11 // pred_region
        %p285 = scmp.lt.s32.totalorder %s23, 0
        %s286 = scalar_select %p285, %s23, 0
        %s287 = smul.addr %s286, 8
        %s288 = scalar_lea.vmem %s3, %s287
      $region24: #{forward.1} parent=11 // pred_fallthru
        _
      // Predicated region
      $region25: #{forward.1} parent=11 // pred_check
        %p289 = pneg %p158
      $region26: #{forward.1} parent=11 // pred_check_branch
        %291 = sbr.rel (%p289) target = $region28
      $region27: #{forward.1} parent=11 // pred_region
        %p292 = scmp.lt.s32.totalorder %s23, 0
        %s293 = scalar_select %p292, %s23, 0
        %s294 = smul.addr %s293, 2
        %s295 = smul.addr %s294, 8
        %s296 = scalar_lea.vmem %s4, %s295
      $region28: #{forward.1} parent=11 // pred_fallthru
        _
      // Predicated region
      $region29: #{forward.1} parent=11 // pred_check
        %p297 = pneg %p179
      $region30: #{forward.1} parent=11 // pred_check_branch
        %299 = sbr.rel (%p297) target = $region32
      $region31: #{forward.1} parent=11 // pred_region
        _
      $region32: #{forward.1} parent=11 // pred_fallthru
        _
      // Predicated region
      $region33: #{forward.1} parent=11 // pred_check
        %p300 = pneg %p200
      $region34: #{forward.1} parent=11 // pred_check_branch
        %302 = sbr.rel (%p300) target = $region36
      $region35: #{forward.1} parent=11 // pred_region
        _
      $region36: #{forward.1} parent=11 // pred_fallthru
        _
    $region12: #{forward.1} parent=5 // pred_fallthru
      _
    %p303 = scmp.lt.s32.totalorder %s14, 4
    // Predicated region
    $region37: #{forward.1} parent=5 // pred_check
      %p304 = pneg %p303
    $region38: #{forward.1} parent=5 // pred_check_branch
      %306 = sbr.rel (%p304) target = $region40
    $region39: #{forward.1} parent=5 // pred_region
      // Predicated region
      $region41: #{forward.1} parent=39 // pred_check
        %p307 = pneg %p100
      $region42: #{forward.1} parent=39 // pred_check_branch
        %309 = sbr.rel (%p307) target = $region44
      $region43: #{forward.1} parent=39 // pred_region
        %s310 = smul.u32 16, %s22
        %p311 = scmp.lt.s32.totalorder %s21, 0
        %s312 = scalar_select %p311, %s21, 0
        %p313 = scmp.lt.s32.totalorder %s310, 63
        %s314 = scalar_select %p313, %s310, 63
        %s315 = smul.addr %s312, 64
        %s316 = sadd.s32 %s314, %s315
        %s317 = smul.addr %s316, 4
        %s318 = scalar_lea.vmem %s2, %s317
        %s319 = smul.u32 16, %s22
      $region44: #{forward.1} parent=39 // pred_fallthru
        _
      // Predicated region
      $region45: #{forward.1} parent=39 // pred_check
        %p320 = pneg %p220
      $region46: #{forward.1} parent=39 // pred_check_branch
        %322 = sbr.rel (%p320) target = $region48
      $region47: #{forward.1} parent=39 // pred_region
        %s323 = smul.u32 256, %s22
        %p324 = scmp.lt.s32.totalorder %s323, 1023
        %s325 = scalar_select %p324, %s323, 1023
        %s326 = smul.addr %s325, 4
        %s327 = scalar_lea.vmem %s7, %s326
        %s328 = smul.u32 256, %s22
      $region48: #{forward.1} parent=39 // pred_fallthru
        _
    $region40: #{forward.1} parent=5 // pred_fallthru
      _
    %p329 = scmp.le.s32.totalorder 1, %s14
    %p330 = scmp.lt.s32.totalorder %s14, 5
    %p331 = pnand %p329, %p330
    %p332 = pneg %p331
    // Predicated region
    $region49: #{forward.1} parent=5 // pred_check
      _
    $region50: #{forward.1} parent=5 // pred_check_branch
      %334 = sbr.rel (%p331) target = $region52
    $region51: #{forward.1} parent=5 // pred_region
      %s335 = ssub.s32 %s14, 1
      %p336 = scmp.lt.s32.totalorder %s23, 0
      %s337 = scalar_select %p336, %s23, 0
      %s338 = smul.addr %s337, 4
      %s339 = scalar_lea.vmem %s0, %s338
      %p340 = pneg %p52
      %p341 = pneg %p49
      %p342 = scmp.lt.s32.totalorder %s23, 0
      %s343 = scalar_select %p342, %s23, 0
      %s344 = smul.addr %s343, 18
      %s345 = smul.addr %s344, 4
      %s346 = scalar_lea.vmem %s1, %s345
      %p347 = pneg %p78
      %p348 = pneg %p75
      %s349 = smul.u32 16, %s24
      %p350 = scmp.lt.s32.totalorder %s23, 0
      %s351 = scalar_select %p350, %s23, 0
      %p352 = scmp.lt.s32.totalorder %s349, 63
      %s353 = scalar_select %p352, %s349, 63
      %s354 = smul.addr %s351, 64
      %s355 = sadd.s32 %s353, %s354
      %s356 = smul.addr %s355, 4
      %s357 = scalar_lea.vmem %s2, %s356
      %p358 = pneg %p106
      %p359 = pneg %p103
      %p360 = scmp.lt.s32.totalorder %s23, 0
      %s361 = scalar_select %p360, %s23, 0
      %s362 = smul.addr %s361, 8
      %s363 = scalar_lea.vmem %s3, %s362
      %p364 = pneg %p132
      %p365 = pneg %p129
      %p366 = scmp.lt.s32.totalorder %s23, 0
      %s367 = scalar_select %p366, %s23, 0
      %s368 = smul.addr %s367, 2
      %s369 = smul.addr %s368, 8
      %s370 = scalar_lea.vmem %s4, %s369
      %p371 = pneg %p158
      %p372 = pneg %p155
      %p373 = pneg %p179
      %p374 = pneg %p176
      %p375 = pneg %p200
      %p376 = pneg %p197
      %s377 = smul.u32 256, %s24
      %p378 = scmp.lt.s32.totalorder %s377, 1023
      %s379 = scalar_select %p378, %s377, 1023
      %s380 = smul.addr %s379, 4
      %s381 = scalar_lea.vmem %s7, %s380
      %p382 = pneg %p226
      %p383 = pneg %p223
      %p384 = pneg %p252
      %p385 = pneg %p249
      %p386 = scmp.lt.s32.totalorder %s23, 0
      %s387 = scalar_select %p386, %s23, 0
      %s388 = smul.addr %s387, 4
      %s389 = smul.addr %s388, 8
      %s390 = scalar_lea.vmem %s8, %s389
      %p391 = scmp.lt.s32.totalorder %s23, 0
      %s392 = scalar_select %p391, %s23, 0
      %s393 = smul.addr %s392, 4
      %s394 = scalar_lea.vmem %s0, %s393
      %p395 = scmp.lt.s32.totalorder %s23, 0
      %s396 = scalar_select %p395, %s23, 0
      %s397 = smul.addr %s396, 18
      %s398 = smul.addr %s397, 4
      %s399 = scalar_lea.vmem %s1, %s398
      %s400 = smul.u32 16, %s24
      %p401 = scmp.lt.s32.totalorder %s23, 0
      %s402 = scalar_select %p401, %s23, 0
      %p403 = scmp.lt.s32.totalorder %s400, 63
      %s404 = scalar_select %p403, %s400, 63
      %s405 = smul.addr %s402, 64
      %s406 = sadd.s32 %s404, %s405
      %s407 = smul.addr %s406, 4
      %s408 = scalar_lea.vmem %s2, %s407
      %s409 = smul.u32 16, %s24
      %p410 = scmp.lt.s32.totalorder %s23, 0
      %s411 = scalar_select %p410, %s23, 0
      %s412 = smul.addr %s411, 8
      %s413 = scalar_lea.vmem %s3, %s412
      %p414 = scmp.lt.s32.totalorder %s23, 0
      %s415 = scalar_select %p414, %s23, 0
      %s416 = smul.addr %s415, 2
      %s417 = smul.addr %s416, 8
      %s418 = scalar_lea.vmem %s4, %s417
      %s419 = smul.u32 256, %s24
      %p420 = scmp.lt.s32.totalorder %s419, 1023
      %s421 = scalar_select %p420, %s419, 1023
      %s422 = smul.addr %s421, 4
      %s423 = scalar_lea.vmem %s7, %s422
      %s424 = smul.u32 256, %s24
      %p425 = scmp.lt.s32.totalorder %s23, 0
      %s426 = scalar_select %p425, %s23, 0
      %s427 = smul.addr %s426, 4
      %s428 = smul.addr %s427, 8
      %s429 = scalar_lea.vmem %s8, %s428
      %p430 = scmp.eq.s32.totalorder %s24, 0
      // Predicated region
      $region53: #{forward.1} parent=51 // pred_check
        %p431 = pneg %p430
      $region54: #{forward.1} parent=51 // pred_check_branch
        %433 = sbr.rel (%p431) target = $region56
      $region55: #{forward.1} parent=51 // pred_region
        %vm434 = vcmask 531456
        %435 = vst.msk [vmem:[#allocation3] sm:$0xff] %vm434, 0.0
        %v436 = vld [vmem:[%s394] sm:$0xf]
        %v437 = vld [vmem:[%s5] sm:$0xf]
        %v438 = vld [vmem:[%s5 + $0x4] sm:$0xf]
        %v439 = vld [vmem:[%s5 + $0x8] sm:$0xf]
        %v440 = vld [vmem:[%s5 + $0xc] sm:$0xf]
        %v441 = vld [vmem:[%s5 + $0x10] sm:$0xf]
        %v442 = vld [vmem:[%s5 + $0x14] sm:$0xf]
        %v443 = vld [vmem:[%s5 + $0x18] sm:$0xf]
        %v444 = vld [vmem:[%s5 + $0x1c] sm:$0xf]
        %v445 = vld [vmem:[%s5 + $0x20] sm:$0xf]
        %v446 = vld [vmem:[%s5 + $0x24] sm:$0xf]
        %v447 = vld [vmem:[%s5 + $0x28] sm:$0xf]
        %v448 = vld [vmem:[%s5 + $0x2c] sm:$0xf]
        %v449 = vld [vmem:[%s5 + $0x30] sm:$0xf]
        %v450 = vld [vmem:[%s5 + $0x34] sm:$0xf]
        %v451 = vld [vmem:[%s5 + $0x38] sm:$0xf]
        %v452 = vld [vmem:[%s5 + $0x3c] sm:$0xf]
        %v469 = vunpack.c.l.b16 %v437
        %v470 = vunpack.c.l.b16 %v438
        %v471 = vunpack.c.l.b16 %v439
        %v472 = vunpack.c.l.b16 %v440
        %v473 = vunpack.c.l.b16 %v441
        %v474 = vunpack.c.l.b16 %v442
        %v475 = vunpack.c.l.b16 %v443
        %v476 = vunpack.c.l.b16 %v444
        %v477 = vunpack.c.l.b16 %v445
        %v478 = vunpack.c.l.b16 %v446
        %v479 = vunpack.c.l.b16 %v447
        %v480 = vunpack.c.l.b16 %v448
        %v481 = vunpack.c.l.b16 %v449
        %v482 = vunpack.c.l.b16 %v450
        %v483 = vunpack.c.l.b16 %v451
        %v484 = vunpack.c.l.b16 %v452
        %v485 = vpack.c.b16 %v470, %v469
        %v486 = vpack.c.b16 %v472, %v471
        %v487 = vpack.c.b16 %v474, %v473
        %v488 = vpack.c.b16 %v476, %v475
        %v489 = vpack.c.b16 %v478, %v477
        %v490 = vpack.c.b16 %v480, %v479
        %v491 = vpack.c.b16 %v482, %v481
        %v492 = vpack.c.b16 %v484, %v483
        %501 = vmatpush.bf16.msra.mxu0 %v492
        %502 = vmatpush.bf16.msra.mxu0 %v491
        %503 = vmatpush.bf16.msra.mxu0 %v490
        %504 = vmatpush.bf16.msra.mxu0 %v489
        %505 = vmatpush.bf16.msra.mxu0 %v488
        %506 = vmatpush.bf16.msra.mxu0 %v487
        %507 = vmatpush.bf16.msra.mxu0 %v486
        %508 = vmatpush.bf16.msra.mxu0 %v485
        %509 = vmatmul.bf16.gmra.mxu0 %v436
        %v510 = vpop.f32.mrf.mxu0
        %v511 = vadd.f32 0.0, %v510
        %v512 = vpop.f32.mrf.mxu0
        %513 = vdwg.mxu0
        %515 = vset.pattern.permute.xlu0 0
        %516 = vperm.xlu0 %515, %v511
        %v517 = vpop.permute.xlu0 %516
        %v519 = vrcp.pop %v517
        %v520 = vmul.f32 %v517, %v519
        %v521 = vsub.f32 1.0, %v520
        %v522 = vmul.f32 %v519, %v521
        %v523 = vadd.f32 %v519, %v522
        %vm524 = vweird.f32 %v517
        %vm525 = vweird.f32 %v519
        %vm526 = vmor %vm524, %vm525
        %v527 = vsel %vm526, %v519, %v523
        %v528 = vand.u32 2147483647, %v517
        %vm529 = vcmp.eq.f32.partialorder %v528, 8.507059e+37
        %v530 = vand.u32 %v517, 2147483648
        %v531 = vor.u32 1.1754944e-38, %v530
        %v532 = vsel %vm529, %v531, %v527
        %v533 = vmul.f32 %v511, %v532
        %v534 = vld [vmem:[%s399] sm:$0xff]
        %v535 = vld [vmem:[%s399 + $0x8] sm:$0xff]
        %v536 = vld [vmem:[%s399 + $0x10] sm:$0xff]
        %v537 = vld [vmem:[%s399 + $0x18] sm:$0xff]
        %v538 = vld [vmem:[%s399 + $0x20] sm:$0xff]
        %v539 = vld [vmem:[%s399 + $0x28] sm:$0xff]
        %v540 = vld [vmem:[%s399 + $0x30] sm:$0xff]
        %v541 = vld [vmem:[%s399 + $0x38] sm:$0xff]
        %v542 = vld [vmem:[%s399 + $0x40] sm:$0xff]
        %v543 = vld [vmem:[%s6] sm:$0xf]
        %v544 = vld [vmem:[%s6 + $0x4] sm:$0xf]
        %v545 = vld [vmem:[%s6 + $0x8] sm:$0xf]
        %v546 = vld [vmem:[%s6 + $0xc] sm:$0xf]
        %v547 = vld [vmem:[%s6 + $0x10] sm:$0xf]
        %v548 = vld [vmem:[%s6 + $0x14] sm:$0xf]
        %v549 = vld [vmem:[%s6 + $0x18] sm:$0xf]
        %v550 = vld [vmem:[%s6 + $0x1c] sm:$0xf]
        %v551 = vld [vmem:[%s6 + $0x20] sm:$0xf]
        %v552 = vld [vmem:[%s6 + $0x24] sm:$0xf]
        %v553 = vld [vmem:[%s6 + $0x28] sm:$0xf]
        %v554 = vld [vmem:[%s6 + $0x2c] sm:$0xf]
        %v555 = vld [vmem:[%s6 + $0x30] sm:$0xf]
        %v556 = vld [vmem:[%s6 + $0x34] sm:$0xf]
        %v557 = vld [vmem:[%s6 + $0x38] sm:$0xf]
        %v558 = vld [vmem:[%s6 + $0x3c] sm:$0xf]
        %v559 = vld [vmem:[%s6 + $0x40] sm:$0xf]
        %v560 = vld [vmem:[%s6 + $0x44] sm:$0xf]
        %v561 = vld [vmem:[%s6 + $0x48] sm:$0xf]
        %v562 = vld [vmem:[%s6 + $0x4c] sm:$0xf]
        %v563 = vld [vmem:[%s6 + $0x50] sm:$0xf]
        %v564 = vld [vmem:[%s6 + $0x54] sm:$0xf]
        %v565 = vld [vmem:[%s6 + $0x58] sm:$0xf]
        %v566 = vld [vmem:[%s6 + $0x5c] sm:$0xf]
        %v567 = vld [vmem:[%s6 + $0x60] sm:$0xf]
        %v568 = vld [vmem:[%s6 + $0x64] sm:$0xf]
        %v569 = vld [vmem:[%s6 + $0x68] sm:$0xf]
        %v570 = vld [vmem:[%s6 + $0x6c] sm:$0xf]
        %v571 = vld [vmem:[%s6 + $0x70] sm:$0xf]
        %v572 = vld [vmem:[%s6 + $0x74] sm:$0xf]
        %v573 = vld [vmem:[%s6 + $0x78] sm:$0xf]
        %v574 = vld [vmem:[%s6 + $0x7c] sm:$0xf]
        %v575 = vld [vmem:[%s6 + $0x80] sm:$0xf]
        %v576 = vld [vmem:[%s6 + $0x84] sm:$0xf]
        %v577 = vld [vmem:[%s6 + $0x88] sm:$0xf]
        %v578 = vld [vmem:[%s6 + $0x8c] sm:$0xf]
        %v579 = vld [vmem:[%s6 + $0x90] sm:$0xf]
        %v580 = vld [vmem:[%s6 + $0x94] sm:$0xf]
        %v581 = vld [vmem:[%s6 + $0x98] sm:$0xf]
        %v582 = vld [vmem:[%s6 + $0x9c] sm:$0xf]
        %v583 = vld [vmem:[%s6 + $0xa0] sm:$0xf]
        %v584 = vld [vmem:[%s6 + $0xa4] sm:$0xf]
        %v585 = vld [vmem:[%s6 + $0xa8] sm:$0xf]
        %v586 = vld [vmem:[%s6 + $0xac] sm:$0xf]
        %v587 = vld [vmem:[%s6 + $0xb0] sm:$0xf]
        %v588 = vld [vmem:[%s6 + $0xb4] sm:$0xf]
        %v589 = vld [vmem:[%s6 + $0xb8] sm:$0xf]
        %v590 = vld [vmem:[%s6 + $0xbc] sm:$0xf]
        %v591 = vld [vmem:[%s6 + $0xc0] sm:$0xf]
        %v592 = vld [vmem:[%s6 + $0xc4] sm:$0xf]
        %v593 = vld [vmem:[%s6 + $0xc8] sm:$0xf]
        %v594 = vld [vmem:[%s6 + $0xcc] sm:$0xf]
        %v595 = vld [vmem:[%s6 + $0xd0] sm:$0xf]
        %v596 = vld [vmem:[%s6 + $0xd4] sm:$0xf]
        %v597 = vld [vmem:[%s6 + $0xd8] sm:$0xf]
        %v598 = vld [vmem:[%s6 + $0xdc] sm:$0xf]
        %v599 = vld [vmem:[%s6 + $0xe0] sm:$0xf]
        %v600 = vld [vmem:[%s6 + $0xe4] sm:$0xf]
        %v601 = vld [vmem:[%s6 + $0xe8] sm:$0xf]
        %v602 = vld [vmem:[%s6 + $0xec] sm:$0xf]
        %v603 = vld [vmem:[%s6 + $0xf0] sm:$0xf]
        %v604 = vld [vmem:[%s6 + $0xf4] sm:$0xf]
        %v605 = vld [vmem:[%s6 + $0xf8] sm:$0xf]
        %v606 = vld [vmem:[%s6 + $0xfc] sm:$0xf]
        %v607 = vld [vmem:[%s6 + $0x100] sm:$0xf]
        %v608 = vld [vmem:[%s6 + $0x104] sm:$0xf]
        %v609 = vld [vmem:[%s6 + $0x108] sm:$0xf]
        %v610 = vld [vmem:[%s6 + $0x10c] sm:$0xf]
        %v611 = vld [vmem:[%s6 + $0x110] sm:$0xf]
        %v612 = vld [vmem:[%s6 + $0x114] sm:$0xf]
        %v613 = vld [vmem:[%s6 + $0x118] sm:$0xf]
        %v614 = vld [vmem:[%s6 + $0x11c] sm:$0xf]
        %v615 = vld [vmem:[%s6 + $0x120] sm:$0xf]
        %v616 = vld [vmem:[%s6 + $0x124] sm:$0xf]
        %v617 = vld [vmem:[%s6 + $0x128] sm:$0xf]
        %v618 = vld [vmem:[%s6 + $0x12c] sm:$0xf]
        %v619 = vld [vmem:[%s6 + $0x130] sm:$0xf]
        %v620 = vld [vmem:[%s6 + $0x134] sm:$0xf]
        %v621 = vld [vmem:[%s6 + $0x138] sm:$0xf]
        %v622 = vld [vmem:[%s6 + $0x13c] sm:$0xf]
        %v623 = vld [vmem:[%s6 + $0x140] sm:$0xf]
        %v624 = vld [vmem:[%s6 + $0x144] sm:$0xf]
        %v625 = vld [vmem:[%s6 + $0x148] sm:$0xf]
        %v626 = vld [vmem:[%s6 + $0x14c] sm:$0xf]
        %v627 = vld [vmem:[%s6 + $0x150] sm:$0xf]
        %v628 = vld [vmem:[%s6 + $0x154] sm:$0xf]
        %v629 = vld [vmem:[%s6 + $0x158] sm:$0xf]
        %v630 = vld [vmem:[%s6 + $0x15c] sm:$0xf]
        %v631 = vld [vmem:[%s6 + $0x160] sm:$0xf]
        %v632 = vld [vmem:[%s6 + $0x164] sm:$0xf]
        %v633 = vld [vmem:[%s6 + $0x168] sm:$0xf]
        %v634 = vld [vmem:[%s6 + $0x16c] sm:$0xf]
        %v635 = vld [vmem:[%s6 + $0x170] sm:$0xf]
        %v636 = vld [vmem:[%s6 + $0x174] sm:$0xf]
        %v637 = vld [vmem:[%s6 + $0x178] sm:$0xf]
        %v638 = vld [vmem:[%s6 + $0x17c] sm:$0xf]
        %v639 = vld [vmem:[%s6 + $0x180] sm:$0xf]
        %v640 = vld [vmem:[%s6 + $0x184] sm:$0xf]
        %v641 = vld [vmem:[%s6 + $0x188] sm:$0xf]
        %v642 = vld [vmem:[%s6 + $0x18c] sm:$0xf]
        %v643 = vld [vmem:[%s6 + $0x190] sm:$0xf]
        %v644 = vld [vmem:[%s6 + $0x194] sm:$0xf]
        %v645 = vld [vmem:[%s6 + $0x198] sm:$0xf]
        %v646 = vld [vmem:[%s6 + $0x19c] sm:$0xf]
        %v647 = vld [vmem:[%s6 + $0x1a0] sm:$0xf]
        %v648 = vld [vmem:[%s6 + $0x1a4] sm:$0xf]
        %v649 = vld [vmem:[%s6 + $0x1a8] sm:$0xf]
        %v650 = vld [vmem:[%s6 + $0x1ac] sm:$0xf]
        %v651 = vld [vmem:[%s6 + $0x1b0] sm:$0xf]
        %v652 = vld [vmem:[%s6 + $0x1b4] sm:$0xf]
        %v653 = vld [vmem:[%s6 + $0x1b8] sm:$0xf]
        %v654 = vld [vmem:[%s6 + $0x1bc] sm:$0xf]
        %v655 = vld [vmem:[%s6 + $0x1c0] sm:$0xf]
        %v656 = vld [vmem:[%s6 + $0x1c4] sm:$0xf]
        %v657 = vld [vmem:[%s6 + $0x1c8] sm:$0xf]
        %v658 = vld [vmem:[%s6 + $0x1cc] sm:$0xf]
        %v659 = vld [vmem:[%s6 + $0x1d0] sm:$0xf]
        %v660 = vld [vmem:[%s6 + $0x1d4] sm:$0xf]
        %v661 = vld [vmem:[%s6 + $0x1d8] sm:$0xf]
        %v662 = vld [vmem:[%s6 + $0x1dc] sm:$0xf]
        %v663 = vld [vmem:[%s6 + $0x1e0] sm:$0xf]
        %v664 = vld [vmem:[%s6 + $0x1e4] sm:$0xf]
        %v665 = vld [vmem:[%s6 + $0x1e8] sm:$0xf]
        %v666 = vld [vmem:[%s6 + $0x1ec] sm:$0xf]
        %v667 = vld [vmem:[%s6 + $0x1f0] sm:$0xf]
        %v668 = vld [vmem:[%s6 + $0x1f4] sm:$0xf]
        %v669 = vld [vmem:[%s6 + $0x1f8] sm:$0xf]
        %v670 = vld [vmem:[%s6 + $0x1fc] sm:$0xf]
        %v671 = vld [vmem:[%s6 + $0x200] sm:$0xf]
        %v672 = vld [vmem:[%s6 + $0x204] sm:$0xf]
        %v673 = vld [vmem:[%s6 + $0x208] sm:$0xf]
        %v674 = vld [vmem:[%s6 + $0x20c] sm:$0xf]
        %v675 = vld [vmem:[%s6 + $0x210] sm:$0xf]
        %v676 = vld [vmem:[%s6 + $0x214] sm:$0xf]
        %v677 = vld [vmem:[%s6 + $0x218] sm:$0xf]
        %v678 = vld [vmem:[%s6 + $0x21c] sm:$0xf]
        %v679 = vld [vmem:[%s6 + $0x220] sm:$0xf]
        %v680 = vld [vmem:[%s6 + $0x224] sm:$0xf]
        %v681 = vld [vmem:[%s6 + $0x228] sm:$0xf]
        %v682 = vld [vmem:[%s6 + $0x22c] sm:$0xf]
        %v683 = vld [vmem:[%s6 + $0x230] sm:$0xf]
        %v684 = vld [vmem:[%s6 + $0x234] sm:$0xf]
        %v685 = vld [vmem:[%s6 + $0x238] sm:$0xf]
        %v686 = vld [vmem:[%s6 + $0x23c] sm:$0xf]
        %v687 = vld [vmem:[%s6 + $0x240] sm:$0xf]
        %v688 = vld [vmem:[%s6 + $0x244] sm:$0xf]
        %v689 = vld [vmem:[%s6 + $0x248] sm:$0xf]
        %v690 = vld [vmem:[%s6 + $0x24c] sm:$0xf]
        %v691 = vld [vmem:[%s6 + $0x250] sm:$0xf]
        %v692 = vld [vmem:[%s6 + $0x254] sm:$0xf]
        %v693 = vld [vmem:[%s6 + $0x258] sm:$0xf]
        %v694 = vld [vmem:[%s6 + $0x25c] sm:$0xf]
        %v695 = vld [vmem:[%s6 + $0x260] sm:$0xf]
        %v696 = vld [vmem:[%s6 + $0x264] sm:$0xf]
        %v697 = vld [vmem:[%s6 + $0x268] sm:$0xf]
        %v698 = vld [vmem:[%s6 + $0x26c] sm:$0xf]
        %v699 = vld [vmem:[%s6 + $0x270] sm:$0xf]
        %v700 = vld [vmem:[%s6 + $0x274] sm:$0xf]
        %v701 = vld [vmem:[%s6 + $0x278] sm:$0xf]
        %v702 = vld [vmem:[%s6 + $0x27c] sm:$0xf]
        %v703 = vld [vmem:[%s6 + $0x280] sm:$0xf]
        %v704 = vld [vmem:[%s6 + $0x284] sm:$0xf]
        %v705 = vld [vmem:[%s6 + $0x288] sm:$0xf]
        %v706 = vld [vmem:[%s6 + $0x28c] sm:$0xf]
        %v707 = vld [vmem:[%s6 + $0x290] sm:$0xf]
        %v708 = vld [vmem:[%s6 + $0x294] sm:$0xf]
        %v709 = vld [vmem:[%s6 + $0x298] sm:$0xf]
        %v710 = vld [vmem:[%s6 + $0x29c] sm:$0xf]
        %v711 = vld [vmem:[%s6 + $0x2a0] sm:$0xf]
        %v712 = vld [vmem:[%s6 + $0x2a4] sm:$0xf]
        %v713 = vld [vmem:[%s6 + $0x2a8] sm:$0xf]
        %v714 = vld [vmem:[%s6 + $0x2ac] sm:$0xf]
        %v715 = vld [vmem:[%s6 + $0x2b0] sm:$0xf]
        %v716 = vld [vmem:[%s6 + $0x2b4] sm:$0xf]
        %v717 = vld [vmem:[%s6 + $0x2b8] sm:$0xf]
        %v718 = vld [vmem:[%s6 + $0x2bc] sm:$0xf]
        %v719 = vld [vmem:[%s6 + $0x2c0] sm:$0xf]
        %v720 = vld [vmem:[%s6 + $0x2c4] sm:$0xf]
        %v721 = vld [vmem:[%s6 + $0x2c8] sm:$0xf]
        %v722 = vld [vmem:[%s6 + $0x2cc] sm:$0xf]
        %v723 = vld [vmem:[%s6 + $0x2d0] sm:$0xf]
        %v724 = vld [vmem:[%s6 + $0x2d4] sm:$0xf]
        %v725 = vld [vmem:[%s6 + $0x2d8] sm:$0xf]
        %v726 = vld [vmem:[%s6 + $0x2dc] sm:$0xf]
        %v727 = vld [vmem:[%s6 + $0x2e0] sm:$0xf]
        %v728 = vld [vmem:[%s6 + $0x2e4] sm:$0xf]
        %v729 = vld [vmem:[%s6 + $0x2e8] sm:$0xf]
        %v730 = vld [vmem:[%s6 + $0x2ec] sm:$0xf]
        %v731 = vld [vmem:[%s6 + $0x2f0] sm:$0xf]
        %v732 = vld [vmem:[%s6 + $0x2f4] sm:$0xf]
        %v733 = vld [vmem:[%s6 + $0x2f8] sm:$0xf]
        %v734 = vld [vmem:[%s6 + $0x2fc] sm:$0xf]
        %v735 = vld [vmem:[%s6 + $0x300] sm:$0xf]
        %v736 = vld [vmem:[%s6 + $0x304] sm:$0xf]
        %v737 = vld [vmem:[%s6 + $0x308] sm:$0xf]
        %v738 = vld [vmem:[%s6 + $0x30c] sm:$0xf]
        %v739 = vld [vmem:[%s6 + $0x310] sm:$0xf]
        %v740 = vld [vmem:[%s6 + $0x314] sm:$0xf]
        %v741 = vld [vmem:[%s6 + $0x318] sm:$0xf]
        %v742 = vld [vmem:[%s6 + $0x31c] sm:$0xf]
        %v743 = vld [vmem:[%s6 + $0x320] sm:$0xf]
        %v744 = vld [vmem:[%s6 + $0x324] sm:$0xf]
        %v745 = vld [vmem:[%s6 + $0x328] sm:$0xf]
        %v746 = vld [vmem:[%s6 + $0x32c] sm:$0xf]
        %v747 = vld [vmem:[%s6 + $0x330] sm:$0xf]
        %v748 = vld [vmem:[%s6 + $0x334] sm:$0xf]
        %v749 = vld [vmem:[%s6 + $0x338] sm:$0xf]
        %v750 = vld [vmem:[%s6 + $0x33c] sm:$0xf]
        %v751 = vld [vmem:[%s6 + $0x340] sm:$0xf]
        %v752 = vld [vmem:[%s6 + $0x344] sm:$0xf]
        %v753 = vld [vmem:[%s6 + $0x348] sm:$0xf]
        %v754 = vld [vmem:[%s6 + $0x34c] sm:$0xf]
        %v755 = vld [vmem:[%s6 + $0x350] sm:$0xf]
        %v756 = vld [vmem:[%s6 + $0x354] sm:$0xf]
        %v757 = vld [vmem:[%s6 + $0x358] sm:$0xf]
        %v758 = vld [vmem:[%s6 + $0x35c] sm:$0xf]
        %v759 = vld [vmem:[%s6 + $0x360] sm:$0xf]
        %v760 = vld [vmem:[%s6 + $0x364] sm:$0xf]
        %v761 = vld [vmem:[%s6 + $0x368] sm:$0xf]
        %v762 = vld [vmem:[%s6 + $0x36c] sm:$0xf]
        %v763 = vld [vmem:[%s6 + $0x370] sm:$0xf]
        %v764 = vld [vmem:[%s6 + $0x374] sm:$0xf]
        %v765 = vld [vmem:[%s6 + $0x378] sm:$0xf]
        %v766 = vld [vmem:[%s6 + $0x37c] sm:$0xf]
        %v767 = vld [vmem:[%s6 + $0x380] sm:$0xf]
        %v768 = vld [vmem:[%s6 + $0x384] sm:$0xf]
        %v769 = vld [vmem:[%s6 + $0x388] sm:$0xf]
        %v770 = vld [vmem:[%s6 + $0x38c] sm:$0xf]
        %v771 = vld [vmem:[%s6 + $0x390] sm:$0xf]
        %v772 = vld [vmem:[%s6 + $0x394] sm:$0xf]
        %v773 = vld [vmem:[%s6 + $0x398] sm:$0xf]
        %v774 = vld [vmem:[%s6 + $0x39c] sm:$0xf]
        %v775 = vld [vmem:[%s6 + $0x3a0] sm:$0xf]
        %v776 = vld [vmem:[%s6 + $0x3a4] sm:$0xf]
        %v777 = vld [vmem:[%s6 + $0x3a8] sm:$0xf]
        %v778 = vld [vmem:[%s6 + $0x3ac] sm:$0xf]
        %v779 = vld [vmem:[%s6 + $0x3b0] sm:$0xf]
        %v780 = vld [vmem:[%s6 + $0x3b4] sm:$0xf]
        %v781 = vld [vmem:[%s6 + $0x3b8] sm:$0xf]
        %v782 = vld [vmem:[%s6 + $0x3bc] sm:$0xf]
        %v783 = vld [vmem:[%s6 + $0x3c0] sm:$0xf]
        %v784 = vld [vmem:[%s6 + $0x3c4] sm:$0xf]
        %v785 = vld [vmem:[%s6 + $0x3c8] sm:$0xf]
        %v786 = vld [vmem:[%s6 + $0x3cc] sm:$0xf]
        %v787 = vld [vmem:[%s6 + $0x3d0] sm:$0xf]
        %v788 = vld [vmem:[%s6 + $0x3d4] sm:$0xf]
        %v789 = vld [vmem:[%s6 + $0x3d8] sm:$0xf]
        %v790 = vld [vmem:[%s6 + $0x3dc] sm:$0xf]
        %v791 = vld [vmem:[%s6 + $0x3e0] sm:$0xf]
        %v792 = vld [vmem:[%s6 + $0x3e4] sm:$0xf]
        %v793 = vld [vmem:[%s6 + $0x3e8] sm:$0xf]
        %v794 = vld [vmem:[%s6 + $0x3ec] sm:$0xf]
        %v795 = vld [vmem:[%s6 + $0x3f0] sm:$0xf]
        %v796 = vld [vmem:[%s6 + $0x3f4] sm:$0xf]
        %v797 = vld [vmem:[%s6 + $0x3f8] sm:$0xf]
        %v798 = vld [vmem:[%s6 + $0x3fc] sm:$0xf]
        %v799 = vld [vmem:[%s6 + $0x400] sm:$0xf]
        %v800 = vld [vmem:[%s6 + $0x404] sm:$0xf]
        %v801 = vld [vmem:[%s6 + $0x408] sm:$0xf]
        %v802 = vld [vmem:[%s6 + $0x40c] sm:$0xf]
        %v803 = vld [vmem:[%s6 + $0x410] sm:$0xf]
        %v804 = vld [vmem:[%s6 + $0x414] sm:$0xf]
        %v805 = vld [vmem:[%s6 + $0x418] sm:$0xf]
        %v806 = vld [vmem:[%s6 + $0x41c] sm:$0xf]
        %v807 = vld [vmem:[%s6 + $0x420] sm:$0xf]
        %v808 = vld [vmem:[%s6 + $0x424] sm:$0xf]
        %v809 = vld [vmem:[%s6 + $0x428] sm:$0xf]
        %v810 = vld [vmem:[%s6 + $0x42c] sm:$0xf]
        %v811 = vld [vmem:[%s6 + $0x430] sm:$0xf]
        %v812 = vld [vmem:[%s6 + $0x434] sm:$0xf]
        %v813 = vld [vmem:[%s6 + $0x438] sm:$0xf]
        %v814 = vld [vmem:[%s6 + $0x43c] sm:$0xf]
        %v815 = vld [vmem:[%s6 + $0x440] sm:$0xf]
        %v816 = vld [vmem:[%s6 + $0x444] sm:$0xf]
        %v817 = vld [vmem:[%s6 + $0x448] sm:$0xf]
        %v818 = vld [vmem:[%s6 + $0x44c] sm:$0xf]
        %v819 = vld [vmem:[%s6 + $0x450] sm:$0xf]
        %v820 = vld [vmem:[%s6 + $0x454] sm:$0xf]
        %v821 = vld [vmem:[%s6 + $0x458] sm:$0xf]
        %v822 = vld [vmem:[%s6 + $0x45c] sm:$0xf]
        %v823 = vld [vmem:[%s6 + $0x460] sm:$0xf]
        %v824 = vld [vmem:[%s6 + $0x464] sm:$0xf]
        %v825 = vld [vmem:[%s6 + $0x468] sm:$0xf]
        %v826 = vld [vmem:[%s6 + $0x46c] sm:$0xf]
        %v827 = vld [vmem:[%s6 + $0x470] sm:$0xf]
        %v828 = vld [vmem:[%s6 + $0x474] sm:$0xf]
        %v829 = vld [vmem:[%s6 + $0x478] sm:$0xf]
        %v830 = vld [vmem:[%s6 + $0x47c] sm:$0xf]
        %v840 = vunpack.c.l.b16 %v534
        %v841 = vunpack.c.h.b16 %v534
        %v842 = vunpack.c.l.b16 %v535
        %v843 = vunpack.c.h.b16 %v535
        %v844 = vunpack.c.l.b16 %v536
        %v845 = vunpack.c.h.b16 %v536
        %v846 = vunpack.c.l.b16 %v537
        %v847 = vunpack.c.h.b16 %v537
        %v848 = vunpack.c.l.b16 %v538
        %v849 = vunpack.c.h.b16 %v538
        %v850 = vunpack.c.l.b16 %v539
        %v851 = vunpack.c.h.b16 %v539
        %v852 = vunpack.c.l.b16 %v540
        %v853 = vunpack.c.h.b16 %v540
        %v854 = vunpack.c.l.b16 %v541
        %v855 = vunpack.c.h.b16 %v541
        %v856 = vunpack.c.l.b16 %v542
        %v857 = vunpack.c.h.b16 %v542
        %v858 = vpack.c.b16 %v840, %v840
        %v859 = vpack.c.b16 %v841, %v841
        %v860 = vpack.c.b16 %v842, %v842
        %v861 = vpack.c.b16 %v843, %v843
        %v862 = vpack.c.b16 %v844, %v844
        %v863 = vpack.c.b16 %v845, %v845
        %v864 = vpack.c.b16 %v846, %v846
        %v865 = vpack.c.b16 %v847, %v847
        %v866 = vpack.c.b16 %v848, %v848
        %v867 = vpack.c.b16 %v849, %v849
        %v868 = vpack.c.b16 %v850, %v850
        %v869 = vpack.c.b16 %v851, %v851
        %v870 = vpack.c.b16 %v852, %v852
        %v871 = vpack.c.b16 %v853, %v853
        %v872 = vpack.c.b16 %v854, %v854
        %v873 = vpack.c.b16 %v855, %v855
        %v874 = vpack.c.b16 %v856, %v856
        %v875 = vpack.c.b16 %v857, %v857
        %v1182 = vunpack.c.l.b16 %v543
        %v1183 = vunpack.c.l.b16 %v544
        %v1184 = vunpack.c.l.b16 %v545
        %v1185 = vunpack.c.l.b16 %v546
        %v1186 = vunpack.c.l.b16 %v547
        %v1187 = vunpack.c.l.b16 %v548
        %v1188 = vunpack.c.l.b16 %v549
        %v1189 = vunpack.c.l.b16 %v550
        %v1190 = vunpack.c.l.b16 %v551
        %v1191 = vunpack.c.l.b16 %v552
        %v1192 = vunpack.c.l.b16 %v553
        %v1193 = vunpack.c.l.b16 %v554
        %v1194 = vunpack.c.l.b16 %v555
        %v1195 = vunpack.c.l.b16 %v556
        %v1196 = vunpack.c.l.b16 %v557
        %v1197 = vunpack.c.l.b16 %v558
        %v1198 = vunpack.c.l.b16 %v559
        %v1199 = vunpack.c.l.b16 %v560
        %v1200 = vunpack.c.l.b16 %v561
        %v1201 = vunpack.c.l.b16 %v562
        %v1202 = vunpack.c.l.b16 %v563
        %v1203 = vunpack.c.l.b16 %v564
        %v1204 = vunpack.c.l.b16 %v565
        %v1205 = vunpack.c.l.b16 %v566
        %v1206 = vunpack.c.l.b16 %v567
        %v1207 = vunpack.c.l.b16 %v568
        %v1208 = vunpack.c.l.b16 %v569
        %v1209 = vunpack.c.l.b16 %v570
        %v1210 = vunpack.c.l.b16 %v571
        %v1211 = vunpack.c.l.b16 %v572
        %v1212 = vunpack.c.l.b16 %v573
        %v1213 = vunpack.c.l.b16 %v574
        %v1214 = vunpack.c.l.b16 %v575
        %v1215 = vunpack.c.l.b16 %v576
        %v1216 = vunpack.c.l.b16 %v577
        %v1217 = vunpack.c.l.b16 %v578
        %v1218 = vunpack.c.l.b16 %v579
        %v1219 = vunpack.c.l.b16 %v580
        %v1220 = vunpack.c.l.b16 %v581
        %v1221 = vunpack.c.l.b16 %v582
        %v1222 = vunpack.c.l.b16 %v583
        %v1223 = vunpack.c.l.b16 %v584
        %v1224 = vunpack.c.l.b16 %v585
        %v1225 = vunpack.c.l.b16 %v586
        %v1226 = vunpack.c.l.b16 %v587
        %v1227 = vunpack.c.l.b16 %v588
        %v1228 = vunpack.c.l.b16 %v589
        %v1229 = vunpack.c.l.b16 %v590
        %v1230 = vunpack.c.l.b16 %v591
        %v1231 = vunpack.c.l.b16 %v592
        %v1232 = vunpack.c.l.b16 %v593
        %v1233 = vunpack.c.l.b16 %v594
        %v1234 = vunpack.c.l.b16 %v595
        %v1235 = vunpack.c.l.b16 %v596
        %v1236 = vunpack.c.l.b16 %v597
        %v1237 = vunpack.c.l.b16 %v598
        %v1238 = vunpack.c.l.b16 %v599
        %v1239 = vunpack.c.l.b16 %v600
        %v1240 = vunpack.c.l.b16 %v601
        %v1241 = vunpack.c.l.b16 %v602
        %v1242 = vunpack.c.l.b16 %v603
        %v1243 = vunpack.c.l.b16 %v604
        %v1244 = vunpack.c.l.b16 %v605
        %v1245 = vunpack.c.l.b16 %v606
        %v1246 = vunpack.c.l.b16 %v607
        %v1247 = vunpack.c.l.b16 %v608
        %v1248 = vunpack.c.l.b16 %v609
        %v1249 = vunpack.c.l.b16 %v610
        %v1250 = vunpack.c.l.b16 %v611
        %v1251 = vunpack.c.l.b16 %v612
        %v1252 = vunpack.c.l.b16 %v613
        %v1253 = vunpack.c.l.b16 %v614
        %v1254 = vunpack.c.l.b16 %v615
        %v1255 = vunpack.c.l.b16 %v616
        %v1256 = vunpack.c.l.b16 %v617
        %v1257 = vunpack.c.l.b16 %v618
        %v1258 = vunpack.c.l.b16 %v619
        %v1259 = vunpack.c.l.b16 %v620
        %v1260 = vunpack.c.l.b16 %v621
        %v1261 = vunpack.c.l.b16 %v622
        %v1262 = vunpack.c.l.b16 %v623
        %v1263 = vunpack.c.l.b16 %v624
        %v1264 = vunpack.c.l.b16 %v625
        %v1265 = vunpack.c.l.b16 %v626
        %v1266 = vunpack.c.l.b16 %v627
        %v1267 = vunpack.c.l.b16 %v628
        %v1268 = vunpack.c.l.b16 %v629
        %v1269 = vunpack.c.l.b16 %v630
        %v1270 = vunpack.c.l.b16 %v631
        %v1271 = vunpack.c.l.b16 %v632
        %v1272 = vunpack.c.l.b16 %v633
        %v1273 = vunpack.c.l.b16 %v634
        %v1274 = vunpack.c.l.b16 %v635
        %v1275 = vunpack.c.l.b16 %v636
        %v1276 = vunpack.c.l.b16 %v637
        %v1277 = vunpack.c.l.b16 %v638
        %v1278 = vunpack.c.l.b16 %v639
        %v1279 = vunpack.c.l.b16 %v640
        %v1280 = vunpack.c.l.b16 %v641
        %v1281 = vunpack.c.l.b16 %v642
        %v1282 = vunpack.c.l.b16 %v643
        %v1283 = vunpack.c.l.b16 %v644
        %v1284 = vunpack.c.l.b16 %v645
        %v1285 = vunpack.c.l.b16 %v646
        %v1286 = vunpack.c.l.b16 %v647
        %v1287 = vunpack.c.l.b16 %v648
        %v1288 = vunpack.c.l.b16 %v649
        %v1289 = vunpack.c.l.b16 %v650
        %v1290 = vunpack.c.l.b16 %v651
        %v1291 = vunpack.c.l.b16 %v652
        %v1292 = vunpack.c.l.b16 %v653
        %v1293 = vunpack.c.l.b16 %v654
        %v1294 = vunpack.c.l.b16 %v655
        %v1295 = vunpack.c.l.b16 %v656
        %v1296 = vunpack.c.l.b16 %v657
        %v1297 = vunpack.c.l.b16 %v658
        %v1298 = vunpack.c.l.b16 %v659
        %v1299 = vunpack.c.l.b16 %v660
        %v1300 = vunpack.c.l.b16 %v661
        %v1301 = vunpack.c.l.b16 %v662
        %v1302 = vunpack.c.l.b16 %v663
        %v1303 = vunpack.c.l.b16 %v664
        %v1304 = vunpack.c.l.b16 %v665
        %v1305 = vunpack.c.l.b16 %v666
        %v1306 = vunpack.c.l.b16 %v667
        %v1307 = vunpack.c.l.b16 %v668
        %v1308 = vunpack.c.l.b16 %v669
        %v1309 = vunpack.c.l.b16 %v670
        %v1310 = vunpack.c.l.b16 %v671
        %v1311 = vunpack.c.l.b16 %v672
        %v1312 = vunpack.c.l.b16 %v673
        %v1313 = vunpack.c.l.b16 %v674
        %v1314 = vunpack.c.l.b16 %v675
        %v1315 = vunpack.c.l.b16 %v676
        %v1316 = vunpack.c.l.b16 %v677
        %v1317 = vunpack.c.l.b16 %v678
        %v1318 = vunpack.c.l.b16 %v679
        %v1319 = vunpack.c.l.b16 %v680
        %v1320 = vunpack.c.l.b16 %v681
        %v1321 = vunpack.c.l.b16 %v682
        %v1322 = vunpack.c.l.b16 %v683
        %v1323 = vunpack.c.l.b16 %v684
        %v1324 = vunpack.c.l.b16 %v685
        %v1325 = vunpack.c.l.b16 %v686
        %v1326 = vunpack.c.l.b16 %v687
        %v1327 = vunpack.c.l.b16 %v688
        %v1328 = vunpack.c.l.b16 %v689
        %v1329 = vunpack.c.l.b16 %v690
        %v1330 = vunpack.c.l.b16 %v691
        %v1331 = vunpack.c.l.b16 %v692
        %v1332 = vunpack.c.l.b16 %v693
        %v1333 = vunpack.c.l.b16 %v694
        %v1334 = vunpack.c.l.b16 %v695
        %v1335 = vunpack.c.l.b16 %v696
        %v1336 = vunpack.c.l.b16 %v697
        %v1337 = vunpack.c.l.b16 %v698
        %v1338 = vunpack.c.l.b16 %v699
        %v1339 = vunpack.c.l.b16 %v700
        %v1340 = vunpack.c.l.b16 %v701
        %v1341 = vunpack.c.l.b16 %v702
        %v1342 = vunpack.c.l.b16 %v703
        %v1343 = vunpack.c.l.b16 %v704
        %v1344 = vunpack.c.l.b16 %v705
        %v1345 = vunpack.c.l.b16 %v706
        %v1346 = vunpack.c.l.b16 %v707
        %v1347 = vunpack.c.l.b16 %v708
        %v1348 = vunpack.c.l.b16 %v709
        %v1349 = vunpack.c.l.b16 %v710
        %v1350 = vunpack.c.l.b16 %v711
        %v1351 = vunpack.c.l.b16 %v712
        %v1352 = vunpack.c.l.b16 %v713
        %v1353 = vunpack.c.l.b16 %v714
        %v1354 = vunpack.c.l.b16 %v715
        %v1355 = vunpack.c.l.b16 %v716
        %v1356 = vunpack.c.l.b16 %v717
        %v1357 = vunpack.c.l.b16 %v718
        %v1358 = vunpack.c.l.b16 %v719
        %v1359 = vunpack.c.l.b16 %v720
        %v1360 = vunpack.c.l.b16 %v721
        %v1361 = vunpack.c.l.b16 %v722
        %v1362 = vunpack.c.l.b16 %v723
        %v1363 = vunpack.c.l.b16 %v724
        %v1364 = vunpack.c.l.b16 %v725
        %v1365 = vunpack.c.l.b16 %v726
        %v1366 = vunpack.c.l.b16 %v727
        %v1367 = vunpack.c.l.b16 %v728
        %v1368 = vunpack.c.l.b16 %v729
        %v1369 = vunpack.c.l.b16 %v730
        %v1370 = vunpack.c.l.b16 %v731
        %v1371 = vunpack.c.l.b16 %v732
        %v1372 = vunpack.c.l.b16 %v733
        %v1373 = vunpack.c.l.b16 %v734
        %v1374 = vunpack.c.l.b16 %v735
        %v1375 = vunpack.c.l.b16 %v736
        %v1376 = vunpack.c.l.b16 %v737
        %v1377 = vunpack.c.l.b16 %v738
        %v1378 = vunpack.c.l.b16 %v739
        %v1379 = vunpack.c.l.b16 %v740
        %v1380 = vunpack.c.l.b16 %v741
        %v1381 = vunpack.c.l.b16 %v742
        %v1382 = vunpack.c.l.b16 %v743
        %v1383 = vunpack.c.l.b16 %v744
        %v1384 = vunpack.c.l.b16 %v745
        %v1385 = vunpack.c.l.b16 %v746
        %v1386 = vunpack.c.l.b16 %v747
        %v1387 = vunpack.c.l.b16 %v748
        %v1388 = vunpack.c.l.b16 %v749
        %v1389 = vunpack.c.l.b16 %v750
        %v1390 = vunpack.c.l.b16 %v751
        %v1391 = vunpack.c.l.b16 %v752
        %v1392 = vunpack.c.l.b16 %v753
        %v1393 = vunpack.c.l.b16 %v754
        %v1394 = vunpack.c.l.b16 %v755
        %v1395 = vunpack.c.l.b16 %v756
        %v1396 = vunpack.c.l.b16 %v757
        %v1397 = vunpack.c.l.b16 %v758
        %v1398 = vunpack.c.l.b16 %v759
        %v1399 = vunpack.c.l.b16 %v760
        %v1400 = vunpack.c.l.b16 %v761
        %v1401 = vunpack.c.l.b16 %v762
        %v1402 = vunpack.c.l.b16 %v763
        %v1403 = vunpack.c.l.b16 %v764
        %v1404 = vunpack.c.l.b16 %v765
        %v1405 = vunpack.c.l.b16 %v766
        %v1406 = vunpack.c.l.b16 %v767
        %v1407 = vunpack.c.l.b16 %v768
        %v1408 = vunpack.c.l.b16 %v769
        %v1409 = vunpack.c.l.b16 %v770
        %v1410 = vunpack.c.l.b16 %v771
        %v1411 = vunpack.c.l.b16 %v772
        %v1412 = vunpack.c.l.b16 %v773
        %v1413 = vunpack.c.l.b16 %v774
        %v1414 = vunpack.c.l.b16 %v775
        %v1415 = vunpack.c.l.b16 %v776
        %v1416 = vunpack.c.l.b16 %v777
        %v1417 = vunpack.c.l.b16 %v778
        %v1418 = vunpack.c.l.b16 %v779
        %v1419 = vunpack.c.l.b16 %v780
        %v1420 = vunpack.c.l.b16 %v781
        %v1421 = vunpack.c.l.b16 %v782
        %v1422 = vunpack.c.l.b16 %v783
        %v1423 = vunpack.c.l.b16 %v784
        %v1424 = vunpack.c.l.b16 %v785
        %v1425 = vunpack.c.l.b16 %v786
        %v1426 = vunpack.c.l.b16 %v787
        %v1427 = vunpack.c.l.b16 %v788
        %v1428 = vunpack.c.l.b16 %v789
        %v1429 = vunpack.c.l.b16 %v790
        %v1430 = vunpack.c.l.b16 %v791
        %v1431 = vunpack.c.l.b16 %v792
        %v1432 = vunpack.c.l.b16 %v793
        %v1433 = vunpack.c.l.b16 %v794
        %v1434 = vunpack.c.l.b16 %v795
        %v1435 = vunpack.c.l.b16 %v796
        %v1436 = vunpack.c.l.b16 %v797
        %v1437 = vunpack.c.l.b16 %v798
        %v1438 = vunpack.c.l.b16 %v799
        %v1439 = vunpack.c.l.b16 %v800
        %v1440 = vunpack.c.l.b16 %v801
        %v1441 = vunpack.c.l.b16 %v802
        %v1442 = vunpack.c.l.b16 %v803
        %v1443 = vunpack.c.l.b16 %v804
        %v1444 = vunpack.c.l.b16 %v805
        %v1445 = vunpack.c.l.b16 %v806
        %v1446 = vunpack.c.l.b16 %v807
        %v1447 = vunpack.c.l.b16 %v808
        %v1448 = vunpack.c.l.b16 %v809
        %v1449 = vunpack.c.l.b16 %v810
        %v1450 = vunpack.c.l.b16 %v811
        %v1451 = vunpack.c.l.b16 %v812
        %v1452 = vunpack.c.l.b16 %v813
        %v1453 = vunpack.c.l.b16 %v814
        %v1454 = vunpack.c.l.b16 %v815
        %v1455 = vunpack.c.l.b16 %v816
        %v1456 = vunpack.c.l.b16 %v817
        %v1457 = vunpack.c.l.b16 %v818
        %v1458 = vunpack.c.l.b16 %v819
        %v1459 = vunpack.c.l.b16 %v820
        %v1460 = vunpack.c.l.b16 %v821
        %v1461 = vunpack.c.l.b16 %v822
        %v1462 = vunpack.c.l.b16 %v823
        %v1463 = vunpack.c.l.b16 %v824
        %v1464 = vunpack.c.l.b16 %v825
        %v1465 = vunpack.c.l.b16 %v826
        %v1466 = vunpack.c.l.b16 %v827
        %v1467 = vunpack.c.l.b16 %v828
        %v1468 = vunpack.c.l.b16 %v829
        %v1469 = vunpack.c.l.b16 %v830
        %v1470 = vpack.c.b16 %v1183, %v1182
        %v1471 = vpack.c.b16 %v1185, %v1184
        %v1472 = vpack.c.b16 %v1187, %v1186
        %v1473 = vpack.c.b16 %v1189, %v1188
        %v1474 = vpack.c.b16 %v1191, %v1190
        %v1475 = vpack.c.b16 %v1193, %v1192
        %v1476 = vpack.c.b16 %v1195, %v1194
        %v1477 = vpack.c.b16 %v1197, %v1196
        %v1478 = vpack.c.b16 %v1199, %v1198
        %v1479 = vpack.c.b16 %v1201, %v1200
        %v1480 = vpack.c.b16 %v1203, %v1202
        %v1481 = vpack.c.b16 %v1205, %v1204
        %v1482 = vpack.c.b16 %v1207, %v1206
        %v1483 = vpack.c.b16 %v1209, %v1208
        %v1484 = vpack.c.b16 %v1211, %v1210
        %v1485 = vpack.c.b16 %v1213, %v1212
        %v1486 = vpack.c.b16 %v1215, %v1214
        %v1487 = vpack.c.b16 %v1217, %v1216
        %v1488 = vpack.c.b16 %v1219, %v1218
        %v1489 = vpack.c.b16 %v1221, %v1220
        %v1490 = vpack.c.b16 %v1223, %v1222
        %v1491 = vpack.c.b16 %v1225, %v1224
        %v1492 = vpack.c.b16 %v1227, %v1226
        %v1493 = vpack.c.b16 %v1229, %v1228
        %v1494 = vpack.c.b16 %v1231, %v1230
        %v1495 = vpack.c.b16 %v1233, %v1232
        %v1496 = vpack.c.b16 %v1235, %v1234
        %v1497 = vpack.c.b16 %v1237, %v1236
        %v1498 = vpack.c.b16 %v1239, %v1238
        %v1499 = vpack.c.b16 %v1241, %v1240
        %v1500 = vpack.c.b16 %v1243, %v1242
        %v1501 = vpack.c.b16 %v1245, %v1244
        %v1502 = vpack.c.b16 %v1247, %v1246
        %v1503 = vpack.c.b16 %v1249, %v1248
        %v1504 = vpack.c.b16 %v1251, %v1250
        %v1505 = vpack.c.b16 %v1253, %v1252
        %v1506 = vpack.c.b16 %v1255, %v1254
        %v1507 = vpack.c.b16 %v1257, %v1256
        %v1508 = vpack.c.b16 %v1259, %v1258
        %v1509 = vpack.c.b16 %v1261, %v1260
        %v1510 = vpack.c.b16 %v1263, %v1262
        %v1511 = vpack.c.b16 %v1265, %v1264
        %v1512 = vpack.c.b16 %v1267, %v1266
        %v1513 = vpack.c.b16 %v1269, %v1268
        %v1514 = vpack.c.b16 %v1271, %v1270
        %v1515 = vpack.c.b16 %v1273, %v1272
        %v1516 = vpack.c.b16 %v1275, %v1274
        %v1517 = vpack.c.b16 %v1277, %v1276
        %v1518 = vpack.c.b16 %v1279, %v1278
        %v1519 = vpack.c.b16 %v1281, %v1280
        %v1520 = vpack.c.b16 %v1283, %v1282
        %v1521 = vpack.c.b16 %v1285, %v1284
        %v1522 = vpack.c.b16 %v1287, %v1286
        %v1523 = vpack.c.b16 %v1289, %v1288
        %v1524 = vpack.c.b16 %v1291, %v1290
        %v1525 = vpack.c.b16 %v1293, %v1292
        %v1526 = vpack.c.b16 %v1295, %v1294
        %v1527 = vpack.c.b16 %v1297, %v1296
        %v1528 = vpack.c.b16 %v1299, %v1298
        %v1529 = vpack.c.b16 %v1301, %v1300
        %v1530 = vpack.c.b16 %v1303, %v1302
        %v1531 = vpack.c.b16 %v1305, %v1304
        %v1532 = vpack.c.b16 %v1307, %v1306
        %v1533 = vpack.c.b16 %v1309, %v1308
        %v1534 = vpack.c.b16 %v1311, %v1310
        %v1535 = vpack.c.b16 %v1313, %v1312
        %v1536 = vpack.c.b16 %v1315, %v1314
        %v1537 = vpack.c.b16 %v1317, %v1316
        %v1538 = vpack.c.b16 %v1319, %v1318
        %v1539 = vpack.c.b16 %v1321, %v1320
        %v1540 = vpack.c.b16 %v1323, %v1322
        %v1541 = vpack.c.b16 %v1325, %v1324
        %v1542 = vpack.c.b16 %v1327, %v1326
        %v1543 = vpack.c.b16 %v1329, %v1328
        %v1544 = vpack.c.b16 %v1331, %v1330
        %v1545 = vpack.c.b16 %v1333, %v1332
        %v1546 = vpack.c.b16 %v1335, %v1334
        %v1547 = vpack.c.b16 %v1337, %v1336
        %v1548 = vpack.c.b16 %v1339, %v1338
        %v1549 = vpack.c.b16 %v1341, %v1340
        %v1550 = vpack.c.b16 %v1343, %v1342
        %v1551 = vpack.c.b16 %v1345, %v1344
        %v1552 = vpack.c.b16 %v1347, %v1346
        %v1553 = vpack.c.b16 %v1349, %v1348
        %v1554 = vpack.c.b16 %v1351, %v1350
        %v1555 = vpack.c.b16 %v1353, %v1352
        %v1556 = vpack.c.b16 %v1355, %v1354
        %v1557 = vpack.c.b16 %v1357, %v1356
        %v1558 = vpack.c.b16 %v1359, %v1358
        %v1559 = vpack.c.b16 %v1361, %v1360
        %v1560 = vpack.c.b16 %v1363, %v1362
        %v1561 = vpack.c.b16 %v1365, %v1364
        %v1562 = vpack.c.b16 %v1367, %v1366
        %v1563 = vpack.c.b16 %v1369, %v1368
        %v1564 = vpack.c.b16 %v1371, %v1370
        %v1565 = vpack.c.b16 %v1373, %v1372
        %v1566 = vpack.c.b16 %v1375, %v1374
        %v1567 = vpack.c.b16 %v1377, %v1376
        %v1568 = vpack.c.b16 %v1379, %v1378
        %v1569 = vpack.c.b16 %v1381, %v1380
        %v1570 = vpack.c.b16 %v1383, %v1382
        %v1571 = vpack.c.b16 %v1385, %v1384
        %v1572 = vpack.c.b16 %v1387, %v1386
        %v1573 = vpack.c.b16 %v1389, %v1388
        %v1574 = vpack.c.b16 %v1391, %v1390
        %v1575 = vpack.c.b16 %v1393, %v1392
        %v1576 = vpack.c.b16 %v1395, %v1394
        %v1577 = vpack.c.b16 %v1397, %v1396
        %v1578 = vpack.c.b16 %v1399, %v1398
        %v1579 = vpack.c.b16 %v1401, %v1400
        %v1580 = vpack.c.b16 %v1403, %v1402
        %v1581 = vpack.c.b16 %v1405, %v1404
        %v1582 = vpack.c.b16 %v1407, %v1406
        %v1583 = vpack.c.b16 %v1409, %v1408
        %v1584 = vpack.c.b16 %v1411, %v1410
        %v1585 = vpack.c.b16 %v1413, %v1412
        %v1586 = vpack.c.b16 %v1415, %v1414
        %v1587 = vpack.c.b16 %v1417, %v1416
        %v1588 = vpack.c.b16 %v1419, %v1418
        %v1589 = vpack.c.b16 %v1421, %v1420
        %v1590 = vpack.c.b16 %v1423, %v1422
        %v1591 = vpack.c.b16 %v1425, %v1424
        %v1592 = vpack.c.b16 %v1427, %v1426
        %v1593 = vpack.c.b16 %v1429, %v1428
        %v1594 = vpack.c.b16 %v1431, %v1430
        %v1595 = vpack.c.b16 %v1433, %v1432
        %v1596 = vpack.c.b16 %v1435, %v1434
        %v1597 = vpack.c.b16 %v1437, %v1436
        %v1598 = vpack.c.b16 %v1439, %v1438
        %v1599 = vpack.c.b16 %v1441, %v1440
        %v1600 = vpack.c.b16 %v1443, %v1442
        %v1601 = vpack.c.b16 %v1445, %v1444
        %v1602 = vpack.c.b16 %v1447, %v1446
        %v1603 = vpack.c.b16 %v1449, %v1448
        %v1604 = vpack.c.b16 %v1451, %v1450
        %v1605 = vpack.c.b16 %v1453, %v1452
        %v1606 = vpack.c.b16 %v1455, %v1454
        %v1607 = vpack.c.b16 %v1457, %v1456
        %v1608 = vpack.c.b16 %v1459, %v1458
        %v1609 = vpack.c.b16 %v1461, %v1460
        %v1610 = vpack.c.b16 %v1463, %v1462
        %v1611 = vpack.c.b16 %v1465, %v1464
        %v1612 = vpack.c.b16 %v1467, %v1466
        %v1613 = vpack.c.b16 %v1469, %v1468
        %1758 = vmatpush.bf16.msra.mxu0 %v1477
        %1759 = vmatpush.bf16.msra.mxu0 %v1476
        %1760 = vmatpush.bf16.msra.mxu0 %v1475
        %1761 = vmatpush.bf16.msra.mxu0 %v1474
        %1762 = vmatpush.bf16.msra.mxu0 %v1473
        %1763 = vmatpush.bf16.msra.mxu0 %v1472
        %1764 = vmatpush.bf16.msra.mxu0 %v1471
        %1765 = vmatpush.bf16.msra.mxu0 %v1470
        %1766 = vmatmul.bf16.gmra.mxu0 %v858
        %v1767 = vpop.f32.mrf.mxu0
        %v1768 = vadd.f32 0.0, %v1767
        %v1769 = vpop.f32.mrf.mxu0
        %1770 = vdwg.mxu0
        %1771 = vmatpush.bf16.msra.mxu0 %v1485
        %1772 = vmatpush.bf16.msra.mxu0 %v1484
        %1773 = vmatpush.bf16.msra.mxu0 %v1483
        %1774 = vmatpush.bf16.msra.mxu0 %v1482
        %1775 = vmatpush.bf16.msra.mxu0 %v1481
        %1776 = vmatpush.bf16.msra.mxu0 %v1480
        %1777 = vmatpush.bf16.msra.mxu0 %v1479
        %1778 = vmatpush.bf16.msra.mxu0 %v1478
        %1779 = vmatmul.bf16.gmra.mxu0 %v859
        %v1780 = vpop.f32.mrf.mxu0
        %v1781 = vadd.f32 %v1768, %v1780
        %v1782 = vpop.f32.mrf.mxu0
        %1783 = vdwg.mxu0
        %1784 = vmatpush.bf16.msra.mxu0 %v1493
        %1785 = vmatpush.bf16.msra.mxu0 %v1492
        %1786 = vmatpush.bf16.msra.mxu0 %v1491
        %1787 = vmatpush.bf16.msra.mxu0 %v1490
        %1788 = vmatpush.bf16.msra.mxu0 %v1489
        %1789 = vmatpush.bf16.msra.mxu0 %v1488
        %1790 = vmatpush.bf16.msra.mxu0 %v1487
        %1791 = vmatpush.bf16.msra.mxu0 %v1486
        %1792 = vmatmul.bf16.gmra.mxu0 %v860
        %v1793 = vpop.f32.mrf.mxu0
        %v1794 = vadd.f32 %v1781, %v1793
        %v1795 = vpop.f32.mrf.mxu0
        %1796 = vdwg.mxu0
        %1797 = vmatpush.bf16.msra.mxu0 %v1501
        %1798 = vmatpush.bf16.msra.mxu0 %v1500
        %1799 = vmatpush.bf16.msra.mxu0 %v1499
        %1800 = vmatpush.bf16.msra.mxu0 %v1498
        %1801 = vmatpush.bf16.msra.mxu0 %v1497
        %1802 = vmatpush.bf16.msra.mxu0 %v1496
        %1803 = vmatpush.bf16.msra.mxu0 %v1495
        %1804 = vmatpush.bf16.msra.mxu0 %v1494
        %1805 = vmatmul.bf16.gmra.mxu0 %v861
        %v1806 = vpop.f32.mrf.mxu0
        %v1807 = vadd.f32 %v1794, %v1806
        %v1808 = vpop.f32.mrf.mxu0
        %1809 = vdwg.mxu0
        %1810 = vmatpush.bf16.msra.mxu0 %v1509
        %1811 = vmatpush.bf16.msra.mxu0 %v1508
        %1812 = vmatpush.bf16.msra.mxu0 %v1507
        %1813 = vmatpush.bf16.msra.mxu0 %v1506
        %1814 = vmatpush.bf16.msra.mxu0 %v1505
        %1815 = vmatpush.bf16.msra.mxu0 %v1504
        %1816 = vmatpush.bf16.msra.mxu0 %v1503
        %1817 = vmatpush.bf16.msra.mxu0 %v1502
        %1818 = vmatmul.bf16.gmra.mxu0 %v862
        %v1819 = vpop.f32.mrf.mxu0
        %v1820 = vadd.f32 %v1807, %v1819
        %v1821 = vpop.f32.mrf.mxu0
        %1822 = vdwg.mxu0
        %1823 = vmatpush.bf16.msra.mxu0 %v1517
        %1824 = vmatpush.bf16.msra.mxu0 %v1516
        %1825 = vmatpush.bf16.msra.mxu0 %v1515
        %1826 = vmatpush.bf16.msra.mxu0 %v1514
        %1827 = vmatpush.bf16.msra.mxu0 %v1513
        %1828 = vmatpush.bf16.msra.mxu0 %v1512
        %1829 = vmatpush.bf16.msra.mxu0 %v1511
        %1830 = vmatpush.bf16.msra.mxu0 %v1510
        %1831 = vmatmul.bf16.gmra.mxu0 %v863
        %v1832 = vpop.f32.mrf.mxu0
        %v1833 = vadd.f32 %v1820, %v1832
        %v1834 = vpop.f32.mrf.mxu0
        %1835 = vdwg.mxu0
        %1836 = vmatpush.bf16.msra.mxu0 %v1525
        %1837 = vmatpush.bf16.msra.mxu0 %v1524
        %1838 = vmatpush.bf16.msra.mxu0 %v1523
        %1839 = vmatpush.bf16.msra.mxu0 %v1522
        %1840 = vmatpush.bf16.msra.mxu0 %v1521
        %1841 = vmatpush.bf16.msra.mxu0 %v1520
        %1842 = vmatpush.bf16.msra.mxu0 %v1519
        %1843 = vmatpush.bf16.msra.mxu0 %v1518
        %1844 = vmatmul.bf16.gmra.mxu0 %v864
        %v1845 = vpop.f32.mrf.mxu0
        %v1846 = vadd.f32 %v1833, %v1845
        %v1847 = vpop.f32.mrf.mxu0
        %1848 = vdwg.mxu0
        %1849 = vmatpush.bf16.msra.mxu0 %v1533
        %1850 = vmatpush.bf16.msra.mxu0 %v1532
        %1851 = vmatpush.bf16.msra.mxu0 %v1531
        %1852 = vmatpush.bf16.msra.mxu0 %v1530
        %1853 = vmatpush.bf16.msra.mxu0 %v1529
        %1854 = vmatpush.bf16.msra.mxu0 %v1528
        %1855 = vmatpush.bf16.msra.mxu0 %v1527
        %1856 = vmatpush.bf16.msra.mxu0 %v1526
        %1857 = vmatmul.bf16.gmra.mxu0 %v865
        %v1858 = vpop.f32.mrf.mxu0
        %v1859 = vadd.f32 %v1846, %v1858
        %v1860 = vpop.f32.mrf.mxu0
        %1861 = vdwg.mxu0
        %1862 = vmatpush.bf16.msra.mxu0 %v1541
        %1863 = vmatpush.bf16.msra.mxu0 %v1540
        %1864 = vmatpush.bf16.msra.mxu0 %v1539
        %1865 = vmatpush.bf16.msra.mxu0 %v1538
        %1866 = vmatpush.bf16.msra.mxu0 %v1537
        %1867 = vmatpush.bf16.msra.mxu0 %v1536
        %1868 = vmatpush.bf16.msra.mxu0 %v1535
        %1869 = vmatpush.bf16.msra.mxu0 %v1534
        %1870 = vmatmul.bf16.gmra.mxu0 %v866
        %v1871 = vpop.f32.mrf.mxu0
        %v1872 = vadd.f32 %v1859, %v1871
        %v1873 = vpop.f32.mrf.mxu0
        %1874 = vdwg.mxu0
        %1875 = vmatpush.bf16.msra.mxu0 %v1549
        %1876 = vmatpush.bf16.msra.mxu0 %v1548
        %1877 = vmatpush.bf16.msra.mxu0 %v1547
        %1878 = vmatpush.bf16.msra.mxu0 %v1546
        %1879 = vmatpush.bf16.msra.mxu0 %v1545
        %1880 = vmatpush.bf16.msra.mxu0 %v1544
        %1881 = vmatpush.bf16.msra.mxu0 %v1543
        %1882 = vmatpush.bf16.msra.mxu0 %v1542
        %1883 = vmatmul.bf16.gmra.mxu0 %v867
        %v1884 = vpop.f32.mrf.mxu0
        %v1885 = vadd.f32 %v1872, %v1884
        %v1886 = vpop.f32.mrf.mxu0
        %1887 = vdwg.mxu0
        %1888 = vmatpush.bf16.msra.mxu0 %v1557
        %1889 = vmatpush.bf16.msra.mxu0 %v1556
        %1890 = vmatpush.bf16.msra.mxu0 %v1555
        %1891 = vmatpush.bf16.msra.mxu0 %v1554
        %1892 = vmatpush.bf16.msra.mxu0 %v1553
        %1893 = vmatpush.bf16.msra.mxu0 %v1552
        %1894 = vmatpush.bf16.msra.mxu0 %v1551
        %1895 = vmatpush.bf16.msra.mxu0 %v1550
        %1896 = vmatmul.bf16.gmra.mxu0 %v868
        %v1897 = vpop.f32.mrf.mxu0
        %v1898 = vadd.f32 %v1885, %v1897
        %v1899 = vpop.f32.mrf.mxu0
        %1900 = vdwg.mxu0
        %1901 = vmatpush.bf16.msra.mxu0 %v1565
        %1902 = vmatpush.bf16.msra.mxu0 %v1564
        %1903 = vmatpush.bf16.msra.mxu0 %v1563
        %1904 = vmatpush.bf16.msra.mxu0 %v1562
        %1905 = vmatpush.bf16.msra.mxu0 %v1561
        %1906 = vmatpush.bf16.msra.mxu0 %v1560
        %1907 = vmatpush.bf16.msra.mxu0 %v1559
        %1908 = vmatpush.bf16.msra.mxu0 %v1558
        %1909 = vmatmul.bf16.gmra.mxu0 %v869
        %v1910 = vpop.f32.mrf.mxu0
        %v1911 = vadd.f32 %v1898, %v1910
        %v1912 = vpop.f32.mrf.mxu0
        %1913 = vdwg.mxu0
        %1914 = vmatpush.bf16.msra.mxu0 %v1573
        %1915 = vmatpush.bf16.msra.mxu0 %v1572
        %1916 = vmatpush.bf16.msra.mxu0 %v1571
        %1917 = vmatpush.bf16.msra.mxu0 %v1570
        %1918 = vmatpush.bf16.msra.mxu0 %v1569
        %1919 = vmatpush.bf16.msra.mxu0 %v1568
        %1920 = vmatpush.bf16.msra.mxu0 %v1567
        %1921 = vmatpush.bf16.msra.mxu0 %v1566
        %1922 = vmatmul.bf16.gmra.mxu0 %v870
        %v1923 = vpop.f32.mrf.mxu0
        %v1924 = vadd.f32 %v1911, %v1923
        %v1925 = vpop.f32.mrf.mxu0
        %1926 = vdwg.mxu0
        %1927 = vmatpush.bf16.msra.mxu0 %v1581
        %1928 = vmatpush.bf16.msra.mxu0 %v1580
        %1929 = vmatpush.bf16.msra.mxu0 %v1579
        %1930 = vmatpush.bf16.msra.mxu0 %v1578
        %1931 = vmatpush.bf16.msra.mxu0 %v1577
        %1932 = vmatpush.bf16.msra.mxu0 %v1576
        %1933 = vmatpush.bf16.msra.mxu0 %v1575
        %1934 = vmatpush.bf16.msra.mxu0 %v1574
        %1935 = vmatmul.bf16.gmra.mxu0 %v871
        %v1936 = vpop.f32.mrf.mxu0
        %v1937 = vadd.f32 %v1924, %v1936
        %v1938 = vpop.f32.mrf.mxu0
        %1939 = vdwg.mxu0
        %1940 = vmatpush.bf16.msra.mxu0 %v1589
        %1941 = vmatpush.bf16.msra.mxu0 %v1588
        %1942 = vmatpush.bf16.msra.mxu0 %v1587
        %1943 = vmatpush.bf16.msra.mxu0 %v1586
        %1944 = vmatpush.bf16.msra.mxu0 %v1585
        %1945 = vmatpush.bf16.msra.mxu0 %v1584
        %1946 = vmatpush.bf16.msra.mxu0 %v1583
        %1947 = vmatpush.bf16.msra.mxu0 %v1582
        %1948 = vmatmul.bf16.gmra.mxu0 %v872
        %v1949 = vpop.f32.mrf.mxu0
        %v1950 = vadd.f32 %v1937, %v1949
        %v1951 = vpop.f32.mrf.mxu0
        %1952 = vdwg.mxu0
        %1953 = vmatpush.bf16.msra.mxu0 %v1597
        %1954 = vmatpush.bf16.msra.mxu0 %v1596
        %1955 = vmatpush.bf16.msra.mxu0 %v1595
        %1956 = vmatpush.bf16.msra.mxu0 %v1594
        %1957 = vmatpush.bf16.msra.mxu0 %v1593
        %1958 = vmatpush.bf16.msra.mxu0 %v1592
        %1959 = vmatpush.bf16.msra.mxu0 %v1591
        %1960 = vmatpush.bf16.msra.mxu0 %v1590
        %1961 = vmatmul.bf16.gmra.mxu0 %v873
        %v1962 = vpop.f32.mrf.mxu0
        %v1963 = vadd.f32 %v1950, %v1962
        %v1964 = vpop.f32.mrf.mxu0
        %1965 = vdwg.mxu0
        %1966 = vmatpush.bf16.msra.mxu0 %v1605
        %1967 = vmatpush.bf16.msra.mxu0 %v1604
        %1968 = vmatpush.bf16.msra.mxu0 %v1603
        %1969 = vmatpush.bf16.msra.mxu0 %v1602
        %1970 = vmatpush.bf16.msra.mxu0 %v1601
        %1971 = vmatpush.bf16.msra.mxu0 %v1600
        %1972 = vmatpush.bf16.msra.mxu0 %v1599
        %1973 = vmatpush.bf16.msra.mxu0 %v1598
        %1974 = vmatmul.bf16.gmra.mxu0 %v874
        %v1975 = vpop.f32.mrf.mxu0
        %v1976 = vadd.f32 %v1963, %v1975
        %v1977 = vpop.f32.mrf.mxu0
        %1978 = vdwg.mxu0
        %1979 = vmatpush.bf16.msra.mxu0 %v1613
        %1980 = vmatpush.bf16.msra.mxu0 %v1612
        %1981 = vmatpush.bf16.msra.mxu0 %v1611
        %1982 = vmatpush.bf16.msra.mxu0 %v1610
        %1983 = vmatpush.bf16.msra.mxu0 %v1609
        %1984 = vmatpush.bf16.msra.mxu0 %v1608
        %1985 = vmatpush.bf16.msra.mxu0 %v1607
        %1986 = vmatpush.bf16.msra.mxu0 %v1606
        %1987 = vmatmul.bf16.gmra.mxu0 %v875
        %v1988 = vpop.f32.mrf.mxu0
        %v1989 = vadd.f32 %v1976, %v1988
        %v1990 = vpop.f32.mrf.mxu0
        %1991 = vdwg.mxu0
        %1993 = vset.pattern.permute.xlu0 0
        %1994 = vperm.xlu0 %1993, %v1989
        %v1995 = vpop.permute.xlu0 %1994
        %v1997 = vrcp.pop %v1995
        %v1998 = vmul.f32 %v1995, %v1997
        %v1999 = vsub.f32 1.0, %v1998
        %v2000 = vmul.f32 %v1997, %v1999
        %v2001 = vadd.f32 %v1997, %v2000
        %vm2002 = vweird.f32 %v1995
        %vm2003 = vweird.f32 %v1997
        %vm2004 = vmor %vm2002, %vm2003
        %v2005 = vsel %vm2004, %v1997, %v2001
        %v2006 = vand.u32 2147483647, %v1995
        %vm2007 = vcmp.eq.f32.partialorder %v2006, 8.507059e+37
        %v2008 = vand.u32 %v1995, 2147483648
        %v2009 = vor.u32 1.1754944e-38, %v2008
        %v2010 = vsel %vm2007, %v2009, %v2005
        %v2011 = vmul.f32 %v1989, %v2010
        %2013 = vrot.lane.b32.xlu0 %v2011, 127
        %v2014 = vpop.permute.xlu0 %2013
        %vm2016 = vcmask 523264
        %2017 = vst.msk [vmem:[#allocation2] sm:$0xff] %vm2016, %v2014
        %v2018 = vld [vmem:[%s413] sm:$0xff]
        %2020 = vrot.lane.b32.xlu0 %v533, 63
        %v2021 = vpop.permute.xlu0 %2020
        %v2023 = vsel %vm2016, %v2018, %v2021
        %2024 = vst [vmem:[%s429] sm:$0xff] %v2023
        %v2025 = vld [vmem:[%s418] sm:$0xff]
        %v2026 = vld [vmem:[%s418 + $0x8] sm:$0xff]
        %2027 = vst [vmem:[%s429 + $0x10] sm:$0xff] %v2025
        %2028 = vst [vmem:[%s429 + $0x18] sm:$0xff] %v2026
      $region56: #{forward.1} parent=51 // pred_fallthru
        _
      %v2029 = vld [vmem:[#allocation3] sm:$0xff]
      %v2030 = vld [vmem:[%s408] sm:$0xff]
      %v2031 = vld [vmem:[%s408 + $0x8] sm:$0xff]
      %v2032 = vld [vmem:[%s408 + $0x10] sm:$0xff]
      %v2033 = vld [vmem:[%s408 + $0x18] sm:$0xff]
      %v2034 = vld [vmem:[%s408 + $0x20] sm:$0xff]
      %v2035 = vld [vmem:[%s408 + $0x28] sm:$0xff]
      %v2036 = vld [vmem:[%s408 + $0x30] sm:$0xff]
      %v2037 = vld [vmem:[%s408 + $0x38] sm:$0xff]
      %v2038 = vld [vmem:[%s423] sm:$0xf]
      %v2039 = vld [vmem:[%s423 + $0x4] sm:$0xf]
      %v2040 = vld [vmem:[%s423 + $0x8] sm:$0xf]
      %v2041 = vld [vmem:[%s423 + $0xc] sm:$0xf]
      %v2042 = vld [vmem:[%s423 + $0x10] sm:$0xf]
      %v2043 = vld [vmem:[%s423 + $0x14] sm:$0xf]
      %v2044 = vld [vmem:[%s423 + $0x18] sm:$0xf]
      %v2045 = vld [vmem:[%s423 + $0x1c] sm:$0xf]
      %v2046 = vld [vmem:[%s423 + $0x20] sm:$0xf]
      %v2047 = vld [vmem:[%s423 + $0x24] sm:$0xf]
      %v2048 = vld [vmem:[%s423 + $0x28] sm:$0xf]
      %v2049 = vld [vmem:[%s423 + $0x2c] sm:$0xf]
      %v2050 = vld [vmem:[%s423 + $0x30] sm:$0xf]
      %v2051 = vld [vmem:[%s423 + $0x34] sm:$0xf]
      %v2052 = vld [vmem:[%s423 + $0x38] sm:$0xf]
      %v2053 = vld [vmem:[%s423 + $0x3c] sm:$0xf]
      %v2054 = vld [vmem:[%s423 + $0x40] sm:$0xf]
      %v2055 = vld [vmem:[%s423 + $0x44] sm:$0xf]
      %v2056 = vld [vmem:[%s423 + $0x48] sm:$0xf]
      %v2057 = vld [vmem:[%s423 + $0x4c] sm:$0xf]
      %v2058 = vld [vmem:[%s423 + $0x50] sm:$0xf]
      %v2059 = vld [vmem:[%s423 + $0x54] sm:$0xf]
      %v2060 = vld [vmem:[%s423 + $0x58] sm:$0xf]
      %v2061 = vld [vmem:[%s423 + $0x5c] sm:$0xf]
      %v2062 = vld [vmem:[%s423 + $0x60] sm:$0xf]
      %v2063 = vld [vmem:[%s423 + $0x64] sm:$0xf]
      %v2064 = vld [vmem:[%s423 + $0x68] sm:$0xf]
      %v2065 = vld [vmem:[%s423 + $0x6c] sm:$0xf]
      %v2066 = vld [vmem:[%s423 + $0x70] sm:$0xf]
      %v2067 = vld [vmem:[%s423 + $0x74] sm:$0xf]
      %v2068 = vld [vmem:[%s423 + $0x78] sm:$0xf]
      %v2069 = vld [vmem:[%s423 + $0x7c] sm:$0xf]
      %v2070 = vld [vmem:[%s423 + $0x80] sm:$0xf]
      %v2071 = vld [vmem:[%s423 + $0x84] sm:$0xf]
      %v2072 = vld [vmem:[%s423 + $0x88] sm:$0xf]
      %v2073 = vld [vmem:[%s423 + $0x8c] sm:$0xf]
      %v2074 = vld [vmem:[%s423 + $0x90] sm:$0xf]
      %v2075 = vld [vmem:[%s423 + $0x94] sm:$0xf]
      %v2076 = vld [vmem:[%s423 + $0x98] sm:$0xf]
      %v2077 = vld [vmem:[%s423 + $0x9c] sm:$0xf]
      %v2078 = vld [vmem:[%s423 + $0xa0] sm:$0xf]
      %v2079 = vld [vmem:[%s423 + $0xa4] sm:$0xf]
      %v2080 = vld [vmem:[%s423 + $0xa8] sm:$0xf]
      %v2081 = vld [vmem:[%s423 + $0xac] sm:$0xf]
      %v2082 = vld [vmem:[%s423 + $0xb0] sm:$0xf]
      %v2083 = vld [vmem:[%s423 + $0xb4] sm:$0xf]
      %v2084 = vld [vmem:[%s423 + $0xb8] sm:$0xf]
      %v2085 = vld [vmem:[%s423 + $0xbc] sm:$0xf]
      %v2086 = vld [vmem:[%s423 + $0xc0] sm:$0xf]
      %v2087 = vld [vmem:[%s423 + $0xc4] sm:$0xf]
      %v2088 = vld [vmem:[%s423 + $0xc8] sm:$0xf]
      %v2089 = vld [vmem:[%s423 + $0xcc] sm:$0xf]
      %v2090 = vld [vmem:[%s423 + $0xd0] sm:$0xf]
      %v2091 = vld [vmem:[%s423 + $0xd4] sm:$0xf]
      %v2092 = vld [vmem:[%s423 + $0xd8] sm:$0xf]
      %v2093 = vld [vmem:[%s423 + $0xdc] sm:$0xf]
      %v2094 = vld [vmem:[%s423 + $0xe0] sm:$0xf]
      %v2095 = vld [vmem:[%s423 + $0xe4] sm:$0xf]
      %v2096 = vld [vmem:[%s423 + $0xe8] sm:$0xf]
      %v2097 = vld [vmem:[%s423 + $0xec] sm:$0xf]
      %v2098 = vld [vmem:[%s423 + $0xf0] sm:$0xf]
      %v2099 = vld [vmem:[%s423 + $0xf4] sm:$0xf]
      %v2100 = vld [vmem:[%s423 + $0xf8] sm:$0xf]
      %v2101 = vld [vmem:[%s423 + $0xfc] sm:$0xf]
      %v2102 = vld [vmem:[%s423 + $0x100] sm:$0xf]
      %v2103 = vld [vmem:[%s423 + $0x104] sm:$0xf]
      %v2104 = vld [vmem:[%s423 + $0x108] sm:$0xf]
      %v2105 = vld [vmem:[%s423 + $0x10c] sm:$0xf]
      %v2106 = vld [vmem:[%s423 + $0x110] sm:$0xf]
      %v2107 = vld [vmem:[%s423 + $0x114] sm:$0xf]
      %v2108 = vld [vmem:[%s423 + $0x118] sm:$0xf]
      %v2109 = vld [vmem:[%s423 + $0x11c] sm:$0xf]
      %v2110 = vld [vmem:[%s423 + $0x120] sm:$0xf]
      %v2111 = vld [vmem:[%s423 + $0x124] sm:$0xf]
      %v2112 = vld [vmem:[%s423 + $0x128] sm:$0xf]
      %v2113 = vld [vmem:[%s423 + $0x12c] sm:$0xf]
      %v2114 = vld [vmem:[%s423 + $0x130] sm:$0xf]
      %v2115 = vld [vmem:[%s423 + $0x134] sm:$0xf]
      %v2116 = vld [vmem:[%s423 + $0x138] sm:$0xf]
      %v2117 = vld [vmem:[%s423 + $0x13c] sm:$0xf]
      %v2118 = vld [vmem:[%s423 + $0x140] sm:$0xf]
      %v2119 = vld [vmem:[%s423 + $0x144] sm:$0xf]
      %v2120 = vld [vmem:[%s423 + $0x148] sm:$0xf]
      %v2121 = vld [vmem:[%s423 + $0x14c] sm:$0xf]
      %v2122 = vld [vmem:[%s423 + $0x150] sm:$0xf]
      %v2123 = vld [vmem:[%s423 + $0x154] sm:$0xf]
      %v2124 = vld [vmem:[%s423 + $0x158] sm:$0xf]
      %v2125 = vld [vmem:[%s423 + $0x15c] sm:$0xf]
      %v2126 = vld [vmem:[%s423 + $0x160] sm:$0xf]
      %v2127 = vld [vmem:[%s423 + $0x164] sm:$0xf]
      %v2128 = vld [vmem:[%s423 + $0x168] sm:$0xf]
      %v2129 = vld [vmem:[%s423 + $0x16c] sm:$0xf]
      %v2130 = vld [vmem:[%s423 + $0x170] sm:$0xf]
      %v2131 = vld [vmem:[%s423 + $0x174] sm:$0xf]
      %v2132 = vld [vmem:[%s423 + $0x178] sm:$0xf]
      %v2133 = vld [vmem:[%s423 + $0x17c] sm:$0xf]
      %v2134 = vld [vmem:[%s423 + $0x180] sm:$0xf]
      %v2135 = vld [vmem:[%s423 + $0x184] sm:$0xf]
      %v2136 = vld [vmem:[%s423 + $0x188] sm:$0xf]
      %v2137 = vld [vmem:[%s423 + $0x18c] sm:$0xf]
      %v2138 = vld [vmem:[%s423 + $0x190] sm:$0xf]
      %v2139 = vld [vmem:[%s423 + $0x194] sm:$0xf]
      %v2140 = vld [vmem:[%s423 + $0x198] sm:$0xf]
      %v2141 = vld [vmem:[%s423 + $0x19c] sm:$0xf]
      %v2142 = vld [vmem:[%s423 + $0x1a0] sm:$0xf]
      %v2143 = vld [vmem:[%s423 + $0x1a4] sm:$0xf]
      %v2144 = vld [vmem:[%s423 + $0x1a8] sm:$0xf]
      %v2145 = vld [vmem:[%s423 + $0x1ac] sm:$0xf]
      %v2146 = vld [vmem:[%s423 + $0x1b0] sm:$0xf]
      %v2147 = vld [vmem:[%s423 + $0x1b4] sm:$0xf]
      %v2148 = vld [vmem:[%s423 + $0x1b8] sm:$0xf]
      %v2149 = vld [vmem:[%s423 + $0x1bc] sm:$0xf]
      %v2150 = vld [vmem:[%s423 + $0x1c0] sm:$0xf]
      %v2151 = vld [vmem:[%s423 + $0x1c4] sm:$0xf]
      %v2152 = vld [vmem:[%s423 + $0x1c8] sm:$0xf]
      %v2153 = vld [vmem:[%s423 + $0x1cc] sm:$0xf]
      %v2154 = vld [vmem:[%s423 + $0x1d0] sm:$0xf]
      %v2155 = vld [vmem:[%s423 + $0x1d4] sm:$0xf]
      %v2156 = vld [vmem:[%s423 + $0x1d8] sm:$0xf]
      %v2157 = vld [vmem:[%s423 + $0x1dc] sm:$0xf]
      %v2158 = vld [vmem:[%s423 + $0x1e0] sm:$0xf]
      %v2159 = vld [vmem:[%s423 + $0x1e4] sm:$0xf]
      %v2160 = vld [vmem:[%s423 + $0x1e8] sm:$0xf]
      %v2161 = vld [vmem:[%s423 + $0x1ec] sm:$0xf]
      %v2162 = vld [vmem:[%s423 + $0x1f0] sm:$0xf]
      %v2163 = vld [vmem:[%s423 + $0x1f4] sm:$0xf]
      %v2164 = vld [vmem:[%s423 + $0x1f8] sm:$0xf]
      %v2165 = vld [vmem:[%s423 + $0x1fc] sm:$0xf]
      %v2166 = vld [vmem:[%s423 + $0x200] sm:$0xf]
      %v2167 = vld [vmem:[%s423 + $0x204] sm:$0xf]
      %v2168 = vld [vmem:[%s423 + $0x208] sm:$0xf]
      %v2169 = vld [vmem:[%s423 + $0x20c] sm:$0xf]
      %v2170 = vld [vmem:[%s423 + $0x210] sm:$0xf]
      %v2171 = vld [vmem:[%s423 + $0x214] sm:$0xf]
      %v2172 = vld [vmem:[%s423 + $0x218] sm:$0xf]
      %v2173 = vld [vmem:[%s423 + $0x21c] sm:$0xf]
      %v2174 = vld [vmem:[%s423 + $0x220] sm:$0xf]
      %v2175 = vld [vmem:[%s423 + $0x224] sm:$0xf]
      %v2176 = vld [vmem:[%s423 + $0x228] sm:$0xf]
      %v2177 = vld [vmem:[%s423 + $0x22c] sm:$0xf]
      %v2178 = vld [vmem:[%s423 + $0x230] sm:$0xf]
      %v2179 = vld [vmem:[%s423 + $0x234] sm:$0xf]
      %v2180 = vld [vmem:[%s423 + $0x238] sm:$0xf]
      %v2181 = vld [vmem:[%s423 + $0x23c] sm:$0xf]
      %v2182 = vld [vmem:[%s423 + $0x240] sm:$0xf]
      %v2183 = vld [vmem:[%s423 + $0x244] sm:$0xf]
      %v2184 = vld [vmem:[%s423 + $0x248] sm:$0xf]
      %v2185 = vld [vmem:[%s423 + $0x24c] sm:$0xf]
      %v2186 = vld [vmem:[%s423 + $0x250] sm:$0xf]
      %v2187 = vld [vmem:[%s423 + $0x254] sm:$0xf]
      %v2188 = vld [vmem:[%s423 + $0x258] sm:$0xf]
      %v2189 = vld [vmem:[%s423 + $0x25c] sm:$0xf]
      %v2190 = vld [vmem:[%s423 + $0x260] sm:$0xf]
      %v2191 = vld [vmem:[%s423 + $0x264] sm:$0xf]
      %v2192 = vld [vmem:[%s423 + $0x268] sm:$0xf]
      %v2193 = vld [vmem:[%s423 + $0x26c] sm:$0xf]
      %v2194 = vld [vmem:[%s423 + $0x270] sm:$0xf]
      %v2195 = vld [vmem:[%s423 + $0x274] sm:$0xf]
      %v2196 = vld [vmem:[%s423 + $0x278] sm:$0xf]
      %v2197 = vld [vmem:[%s423 + $0x27c] sm:$0xf]
      %v2198 = vld [vmem:[%s423 + $0x280] sm:$0xf]
      %v2199 = vld [vmem:[%s423 + $0x284] sm:$0xf]
      %v2200 = vld [vmem:[%s423 + $0x288] sm:$0xf]
      %v2201 = vld [vmem:[%s423 + $0x28c] sm:$0xf]
      %v2202 = vld [vmem:[%s423 + $0x290] sm:$0xf]
      %v2203 = vld [vmem:[%s423 + $0x294] sm:$0xf]
      %v2204 = vld [vmem:[%s423 + $0x298] sm:$0xf]
      %v2205 = vld [vmem:[%s423 + $0x29c] sm:$0xf]
      %v2206 = vld [vmem:[%s423 + $0x2a0] sm:$0xf]
      %v2207 = vld [vmem:[%s423 + $0x2a4] sm:$0xf]
      %v2208 = vld [vmem:[%s423 + $0x2a8] sm:$0xf]
      %v2209 = vld [vmem:[%s423 + $0x2ac] sm:$0xf]
      %v2210 = vld [vmem:[%s423 + $0x2b0] sm:$0xf]
      %v2211 = vld [vmem:[%s423 + $0x2b4] sm:$0xf]
      %v2212 = vld [vmem:[%s423 + $0x2b8] sm:$0xf]
      %v2213 = vld [vmem:[%s423 + $0x2bc] sm:$0xf]
      %v2214 = vld [vmem:[%s423 + $0x2c0] sm:$0xf]
      %v2215 = vld [vmem:[%s423 + $0x2c4] sm:$0xf]
      %v2216 = vld [vmem:[%s423 + $0x2c8] sm:$0xf]
      %v2217 = vld [vmem:[%s423 + $0x2cc] sm:$0xf]
      %v2218 = vld [vmem:[%s423 + $0x2d0] sm:$0xf]
      %v2219 = vld [vmem:[%s423 + $0x2d4] sm:$0xf]
      %v2220 = vld [vmem:[%s423 + $0x2d8] sm:$0xf]
      %v2221 = vld [vmem:[%s423 + $0x2dc] sm:$0xf]
      %v2222 = vld [vmem:[%s423 + $0x2e0] sm:$0xf]
      %v2223 = vld [vmem:[%s423 + $0x2e4] sm:$0xf]
      %v2224 = vld [vmem:[%s423 + $0x2e8] sm:$0xf]
      %v2225 = vld [vmem:[%s423 + $0x2ec] sm:$0xf]
      %v2226 = vld [vmem:[%s423 + $0x2f0] sm:$0xf]
      %v2227 = vld [vmem:[%s423 + $0x2f4] sm:$0xf]
      %v2228 = vld [vmem:[%s423 + $0x2f8] sm:$0xf]
      %v2229 = vld [vmem:[%s423 + $0x2fc] sm:$0xf]
      %v2230 = vld [vmem:[%s423 + $0x300] sm:$0xf]
      %v2231 = vld [vmem:[%s423 + $0x304] sm:$0xf]
      %v2232 = vld [vmem:[%s423 + $0x308] sm:$0xf]
      %v2233 = vld [vmem:[%s423 + $0x30c] sm:$0xf]
      %v2234 = vld [vmem:[%s423 + $0x310] sm:$0xf]
      %v2235 = vld [vmem:[%s423 + $0x314] sm:$0xf]
      %v2236 = vld [vmem:[%s423 + $0x318] sm:$0xf]
      %v2237 = vld [vmem:[%s423 + $0x31c] sm:$0xf]
      %v2238 = vld [vmem:[%s423 + $0x320] sm:$0xf]
      %v2239 = vld [vmem:[%s423 + $0x324] sm:$0xf]
      %v2240 = vld [vmem:[%s423 + $0x328] sm:$0xf]
      %v2241 = vld [vmem:[%s423 + $0x32c] sm:$0xf]
      %v2242 = vld [vmem:[%s423 + $0x330] sm:$0xf]
      %v2243 = vld [vmem:[%s423 + $0x334] sm:$0xf]
      %v2244 = vld [vmem:[%s423 + $0x338] sm:$0xf]
      %v2245 = vld [vmem:[%s423 + $0x33c] sm:$0xf]
      %v2246 = vld [vmem:[%s423 + $0x340] sm:$0xf]
      %v2247 = vld [vmem:[%s423 + $0x344] sm:$0xf]
      %v2248 = vld [vmem:[%s423 + $0x348] sm:$0xf]
      %v2249 = vld [vmem:[%s423 + $0x34c] sm:$0xf]
      %v2250 = vld [vmem:[%s423 + $0x350] sm:$0xf]
      %v2251 = vld [vmem:[%s423 + $0x354] sm:$0xf]
      %v2252 = vld [vmem:[%s423 + $0x358] sm:$0xf]
      %v2253 = vld [vmem:[%s423 + $0x35c] sm:$0xf]
      %v2254 = vld [vmem:[%s423 + $0x360] sm:$0xf]
      %v2255 = vld [vmem:[%s423 + $0x364] sm:$0xf]
      %v2256 = vld [vmem:[%s423 + $0x368] sm:$0xf]
      %v2257 = vld [vmem:[%s423 + $0x36c] sm:$0xf]
      %v2258 = vld [vmem:[%s423 + $0x370] sm:$0xf]
      %v2259 = vld [vmem:[%s423 + $0x374] sm:$0xf]
      %v2260 = vld [vmem:[%s423 + $0x378] sm:$0xf]
      %v2261 = vld [vmem:[%s423 + $0x37c] sm:$0xf]
      %v2262 = vld [vmem:[%s423 + $0x380] sm:$0xf]
      %v2263 = vld [vmem:[%s423 + $0x384] sm:$0xf]
      %v2264 = vld [vmem:[%s423 + $0x388] sm:$0xf]
      %v2265 = vld [vmem:[%s423 + $0x38c] sm:$0xf]
      %v2266 = vld [vmem:[%s423 + $0x390] sm:$0xf]
      %v2267 = vld [vmem:[%s423 + $0x394] sm:$0xf]
      %v2268 = vld [vmem:[%s423 + $0x398] sm:$0xf]
      %v2269 = vld [vmem:[%s423 + $0x39c] sm:$0xf]
      %v2270 = vld [vmem:[%s423 + $0x3a0] sm:$0xf]
      %v2271 = vld [vmem:[%s423 + $0x3a4] sm:$0xf]
      %v2272 = vld [vmem:[%s423 + $0x3a8] sm:$0xf]
      %v2273 = vld [vmem:[%s423 + $0x3ac] sm:$0xf]
      %v2274 = vld [vmem:[%s423 + $0x3b0] sm:$0xf]
      %v2275 = vld [vmem:[%s423 + $0x3b4] sm:$0xf]
      %v2276 = vld [vmem:[%s423 + $0x3b8] sm:$0xf]
      %v2277 = vld [vmem:[%s423 + $0x3bc] sm:$0xf]
      %v2278 = vld [vmem:[%s423 + $0x3c0] sm:$0xf]
      %v2279 = vld [vmem:[%s423 + $0x3c4] sm:$0xf]
      %v2280 = vld [vmem:[%s423 + $0x3c8] sm:$0xf]
      %v2281 = vld [vmem:[%s423 + $0x3cc] sm:$0xf]
      %v2282 = vld [vmem:[%s423 + $0x3d0] sm:$0xf]
      %v2283 = vld [vmem:[%s423 + $0x3d4] sm:$0xf]
      %v2284 = vld [vmem:[%s423 + $0x3d8] sm:$0xf]
      %v2285 = vld [vmem:[%s423 + $0x3dc] sm:$0xf]
      %v2286 = vld [vmem:[%s423 + $0x3e0] sm:$0xf]
      %v2287 = vld [vmem:[%s423 + $0x3e4] sm:$0xf]
      %v2288 = vld [vmem:[%s423 + $0x3e8] sm:$0xf]
      %v2289 = vld [vmem:[%s423 + $0x3ec] sm:$0xf]
      %v2290 = vld [vmem:[%s423 + $0x3f0] sm:$0xf]
      %v2291 = vld [vmem:[%s423 + $0x3f4] sm:$0xf]
      %v2292 = vld [vmem:[%s423 + $0x3f8] sm:$0xf]
      %v2293 = vld [vmem:[%s423 + $0x3fc] sm:$0xf]
      %v2302 = vunpack.c.l.b16 %v2030
      %v2303 = vunpack.c.h.b16 %v2030
      %v2304 = vunpack.c.l.b16 %v2031
      %v2305 = vunpack.c.h.b16 %v2031
      %v2306 = vunpack.c.l.b16 %v2032
      %v2307 = vunpack.c.h.b16 %v2032
      %v2308 = vunpack.c.l.b16 %v2033
      %v2309 = vunpack.c.h.b16 %v2033
      %v2310 = vunpack.c.l.b16 %v2034
      %v2311 = vunpack.c.h.b16 %v2034
      %v2312 = vunpack.c.l.b16 %v2035
      %v2313 = vunpack.c.h.b16 %v2035
      %v2314 = vunpack.c.l.b16 %v2036
      %v2315 = vunpack.c.h.b16 %v2036
      %v2316 = vunpack.c.l.b16 %v2037
      %v2317 = vunpack.c.h.b16 %v2037
      %v2318 = vpack.c.b16 %v2302, %v2302
      %v2319 = vpack.c.b16 %v2303, %v2303
      %v2320 = vpack.c.b16 %v2304, %v2304
      %v2321 = vpack.c.b16 %v2305, %v2305
      %v2322 = vpack.c.b16 %v2306, %v2306
      %v2323 = vpack.c.b16 %v2307, %v2307
      %v2324 = vpack.c.b16 %v2308, %v2308
      %v2325 = vpack.c.b16 %v2309, %v2309
      %v2326 = vpack.c.b16 %v2310, %v2310
      %v2327 = vpack.c.b16 %v2311, %v2311
      %v2328 = vpack.c.b16 %v2312, %v2312
      %v2329 = vpack.c.b16 %v2313, %v2313
      %v2330 = vpack.c.b16 %v2314, %v2314
      %v2331 = vpack.c.b16 %v2315, %v2315
      %v2332 = vpack.c.b16 %v2316, %v2316
      %v2333 = vpack.c.b16 %v2317, %v2317
      %v2606 = vunpack.c.l.b16 %v2038
      %v2607 = vunpack.c.l.b16 %v2039
      %v2608 = vunpack.c.l.b16 %v2040
      %v2609 = vunpack.c.l.b16 %v2041
      %v2610 = vunpack.c.l.b16 %v2042
      %v2611 = vunpack.c.l.b16 %v2043
      %v2612 = vunpack.c.l.b16 %v2044
      %v2613 = vunpack.c.l.b16 %v2045
      %v2614 = vunpack.c.l.b16 %v2046
      %v2615 = vunpack.c.l.b16 %v2047
      %v2616 = vunpack.c.l.b16 %v2048
      %v2617 = vunpack.c.l.b16 %v2049
      %v2618 = vunpack.c.l.b16 %v2050
      %v2619 = vunpack.c.l.b16 %v2051
      %v2620 = vunpack.c.l.b16 %v2052
      %v2621 = vunpack.c.l.b16 %v2053
      %v2622 = vunpack.c.l.b16 %v2054
      %v2623 = vunpack.c.l.b16 %v2055
      %v2624 = vunpack.c.l.b16 %v2056
      %v2625 = vunpack.c.l.b16 %v2057
      %v2626 = vunpack.c.l.b16 %v2058
      %v2627 = vunpack.c.l.b16 %v2059
      %v2628 = vunpack.c.l.b16 %v2060
      %v2629 = vunpack.c.l.b16 %v2061
      %v2630 = vunpack.c.l.b16 %v2062
      %v2631 = vunpack.c.l.b16 %v2063
      %v2632 = vunpack.c.l.b16 %v2064
      %v2633 = vunpack.c.l.b16 %v2065
      %v2634 = vunpack.c.l.b16 %v2066
      %v2635 = vunpack.c.l.b16 %v2067
      %v2636 = vunpack.c.l.b16 %v2068
      %v2637 = vunpack.c.l.b16 %v2069
      %v2638 = vunpack.c.l.b16 %v2070
      %v2639 = vunpack.c.l.b16 %v2071
      %v2640 = vunpack.c.l.b16 %v2072
      %v2641 = vunpack.c.l.b16 %v2073
      %v2642 = vunpack.c.l.b16 %v2074
      %v2643 = vunpack.c.l.b16 %v2075
      %v2644 = vunpack.c.l.b16 %v2076
      %v2645 = vunpack.c.l.b16 %v2077
      %v2646 = vunpack.c.l.b16 %v2078
      %v2647 = vunpack.c.l.b16 %v2079
      %v2648 = vunpack.c.l.b16 %v2080
      %v2649 = vunpack.c.l.b16 %v2081
      %v2650 = vunpack.c.l.b16 %v2082
      %v2651 = vunpack.c.l.b16 %v2083
      %v2652 = vunpack.c.l.b16 %v2084
      %v2653 = vunpack.c.l.b16 %v2085
      %v2654 = vunpack.c.l.b16 %v2086
      %v2655 = vunpack.c.l.b16 %v2087
      %v2656 = vunpack.c.l.b16 %v2088
      %v2657 = vunpack.c.l.b16 %v2089
      %v2658 = vunpack.c.l.b16 %v2090
      %v2659 = vunpack.c.l.b16 %v2091
      %v2660 = vunpack.c.l.b16 %v2092
      %v2661 = vunpack.c.l.b16 %v2093
      %v2662 = vunpack.c.l.b16 %v2094
      %v2663 = vunpack.c.l.b16 %v2095
      %v2664 = vunpack.c.l.b16 %v2096
      %v2665 = vunpack.c.l.b16 %v2097
      %v2666 = vunpack.c.l.b16 %v2098
      %v2667 = vunpack.c.l.b16 %v2099
      %v2668 = vunpack.c.l.b16 %v2100
      %v2669 = vunpack.c.l.b16 %v2101
      %v2670 = vunpack.c.l.b16 %v2102
      %v2671 = vunpack.c.l.b16 %v2103
      %v2672 = vunpack.c.l.b16 %v2104
      %v2673 = vunpack.c.l.b16 %v2105
      %v2674 = vunpack.c.l.b16 %v2106
      %v2675 = vunpack.c.l.b16 %v2107
      %v2676 = vunpack.c.l.b16 %v2108
      %v2677 = vunpack.c.l.b16 %v2109
      %v2678 = vunpack.c.l.b16 %v2110
      %v2679 = vunpack.c.l.b16 %v2111
      %v2680 = vunpack.c.l.b16 %v2112
      %v2681 = vunpack.c.l.b16 %v2113
      %v2682 = vunpack.c.l.b16 %v2114
      %v2683 = vunpack.c.l.b16 %v2115
      %v2684 = vunpack.c.l.b16 %v2116
      %v2685 = vunpack.c.l.b16 %v2117
      %v2686 = vunpack.c.l.b16 %v2118
      %v2687 = vunpack.c.l.b16 %v2119
      %v2688 = vunpack.c.l.b16 %v2120
      %v2689 = vunpack.c.l.b16 %v2121
      %v2690 = vunpack.c.l.b16 %v2122
      %v2691 = vunpack.c.l.b16 %v2123
      %v2692 = vunpack.c.l.b16 %v2124
      %v2693 = vunpack.c.l.b16 %v2125
      %v2694 = vunpack.c.l.b16 %v2126
      %v2695 = vunpack.c.l.b16 %v2127
      %v2696 = vunpack.c.l.b16 %v2128
      %v2697 = vunpack.c.l.b16 %v2129
      %v2698 = vunpack.c.l.b16 %v2130
      %v2699 = vunpack.c.l.b16 %v2131
      %v2700 = vunpack.c.l.b16 %v2132
      %v2701 = vunpack.c.l.b16 %v2133
      %v2702 = vunpack.c.l.b16 %v2134
      %v2703 = vunpack.c.l.b16 %v2135
      %v2704 = vunpack.c.l.b16 %v2136
      %v2705 = vunpack.c.l.b16 %v2137
      %v2706 = vunpack.c.l.b16 %v2138
      %v2707 = vunpack.c.l.b16 %v2139
      %v2708 = vunpack.c.l.b16 %v2140
      %v2709 = vunpack.c.l.b16 %v2141
      %v2710 = vunpack.c.l.b16 %v2142
      %v2711 = vunpack.c.l.b16 %v2143
      %v2712 = vunpack.c.l.b16 %v2144
      %v2713 = vunpack.c.l.b16 %v2145
      %v2714 = vunpack.c.l.b16 %v2146
      %v2715 = vunpack.c.l.b16 %v2147
      %v2716 = vunpack.c.l.b16 %v2148
      %v2717 = vunpack.c.l.b16 %v2149
      %v2718 = vunpack.c.l.b16 %v2150
      %v2719 = vunpack.c.l.b16 %v2151
      %v2720 = vunpack.c.l.b16 %v2152
      %v2721 = vunpack.c.l.b16 %v2153
      %v2722 = vunpack.c.l.b16 %v2154
      %v2723 = vunpack.c.l.b16 %v2155
      %v2724 = vunpack.c.l.b16 %v2156
      %v2725 = vunpack.c.l.b16 %v2157
      %v2726 = vunpack.c.l.b16 %v2158
      %v2727 = vunpack.c.l.b16 %v2159
      %v2728 = vunpack.c.l.b16 %v2160
      %v2729 = vunpack.c.l.b16 %v2161
      %v2730 = vunpack.c.l.b16 %v2162
      %v2731 = vunpack.c.l.b16 %v2163
      %v2732 = vunpack.c.l.b16 %v2164
      %v2733 = vunpack.c.l.b16 %v2165
      %v2734 = vunpack.c.l.b16 %v2166
      %v2735 = vunpack.c.l.b16 %v2167
      %v2736 = vunpack.c.l.b16 %v2168
      %v2737 = vunpack.c.l.b16 %v2169
      %v2738 = vunpack.c.l.b16 %v2170
      %v2739 = vunpack.c.l.b16 %v2171
      %v2740 = vunpack.c.l.b16 %v2172
      %v2741 = vunpack.c.l.b16 %v2173
      %v2742 = vunpack.c.l.b16 %v2174
      %v2743 = vunpack.c.l.b16 %v2175
      %v2744 = vunpack.c.l.b16 %v2176
      %v2745 = vunpack.c.l.b16 %v2177
      %v2746 = vunpack.c.l.b16 %v2178
      %v2747 = vunpack.c.l.b16 %v2179
      %v2748 = vunpack.c.l.b16 %v2180
      %v2749 = vunpack.c.l.b16 %v2181
      %v2750 = vunpack.c.l.b16 %v2182
      %v2751 = vunpack.c.l.b16 %v2183
      %v2752 = vunpack.c.l.b16 %v2184
      %v2753 = vunpack.c.l.b16 %v2185
      %v2754 = vunpack.c.l.b16 %v2186
      %v2755 = vunpack.c.l.b16 %v2187
      %v2756 = vunpack.c.l.b16 %v2188
      %v2757 = vunpack.c.l.b16 %v2189
      %v2758 = vunpack.c.l.b16 %v2190
      %v2759 = vunpack.c.l.b16 %v2191
      %v2760 = vunpack.c.l.b16 %v2192
      %v2761 = vunpack.c.l.b16 %v2193
      %v2762 = vunpack.c.l.b16 %v2194
      %v2763 = vunpack.c.l.b16 %v2195
      %v2764 = vunpack.c.l.b16 %v2196
      %v2765 = vunpack.c.l.b16 %v2197
      %v2766 = vunpack.c.l.b16 %v2198
      %v2767 = vunpack.c.l.b16 %v2199
      %v2768 = vunpack.c.l.b16 %v2200
      %v2769 = vunpack.c.l.b16 %v2201
      %v2770 = vunpack.c.l.b16 %v2202
      %v2771 = vunpack.c.l.b16 %v2203
      %v2772 = vunpack.c.l.b16 %v2204
      %v2773 = vunpack.c.l.b16 %v2205
      %v2774 = vunpack.c.l.b16 %v2206
      %v2775 = vunpack.c.l.b16 %v2207
      %v2776 = vunpack.c.l.b16 %v2208
      %v2777 = vunpack.c.l.b16 %v2209
      %v2778 = vunpack.c.l.b16 %v2210
      %v2779 = vunpack.c.l.b16 %v2211
      %v2780 = vunpack.c.l.b16 %v2212
      %v2781 = vunpack.c.l.b16 %v2213
      %v2782 = vunpack.c.l.b16 %v2214
      %v2783 = vunpack.c.l.b16 %v2215
      %v2784 = vunpack.c.l.b16 %v2216
      %v2785 = vunpack.c.l.b16 %v2217
      %v2786 = vunpack.c.l.b16 %v2218
      %v2787 = vunpack.c.l.b16 %v2219
      %v2788 = vunpack.c.l.b16 %v2220
      %v2789 = vunpack.c.l.b16 %v2221
      %v2790 = vunpack.c.l.b16 %v2222
      %v2791 = vunpack.c.l.b16 %v2223
      %v2792 = vunpack.c.l.b16 %v2224
      %v2793 = vunpack.c.l.b16 %v2225
      %v2794 = vunpack.c.l.b16 %v2226
      %v2795 = vunpack.c.l.b16 %v2227
      %v2796 = vunpack.c.l.b16 %v2228
      %v2797 = vunpack.c.l.b16 %v2229
      %v2798 = vunpack.c.l.b16 %v2230
      %v2799 = vunpack.c.l.b16 %v2231
      %v2800 = vunpack.c.l.b16 %v2232
      %v2801 = vunpack.c.l.b16 %v2233
      %v2802 = vunpack.c.l.b16 %v2234
      %v2803 = vunpack.c.l.b16 %v2235
      %v2804 = vunpack.c.l.b16 %v2236
      %v2805 = vunpack.c.l.b16 %v2237
      %v2806 = vunpack.c.l.b16 %v2238
      %v2807 = vunpack.c.l.b16 %v2239
      %v2808 = vunpack.c.l.b16 %v2240
      %v2809 = vunpack.c.l.b16 %v2241
      %v2810 = vunpack.c.l.b16 %v2242
      %v2811 = vunpack.c.l.b16 %v2243
      %v2812 = vunpack.c.l.b16 %v2244
      %v2813 = vunpack.c.l.b16 %v2245
      %v2814 = vunpack.c.l.b16 %v2246
      %v2815 = vunpack.c.l.b16 %v2247
      %v2816 = vunpack.c.l.b16 %v2248
      %v2817 = vunpack.c.l.b16 %v2249
      %v2818 = vunpack.c.l.b16 %v2250
      %v2819 = vunpack.c.l.b16 %v2251
      %v2820 = vunpack.c.l.b16 %v2252
      %v2821 = vunpack.c.l.b16 %v2253
      %v2822 = vunpack.c.l.b16 %v2254
      %v2823 = vunpack.c.l.b16 %v2255
      %v2824 = vunpack.c.l.b16 %v2256
      %v2825 = vunpack.c.l.b16 %v2257
      %v2826 = vunpack.c.l.b16 %v2258
      %v2827 = vunpack.c.l.b16 %v2259
      %v2828 = vunpack.c.l.b16 %v2260
      %v2829 = vunpack.c.l.b16 %v2261
      %v2830 = vunpack.c.l.b16 %v2262
      %v2831 = vunpack.c.l.b16 %v2263
      %v2832 = vunpack.c.l.b16 %v2264
      %v2833 = vunpack.c.l.b16 %v2265
      %v2834 = vunpack.c.l.b16 %v2266
      %v2835 = vunpack.c.l.b16 %v2267
      %v2836 = vunpack.c.l.b16 %v2268
      %v2837 = vunpack.c.l.b16 %v2269
      %v2838 = vunpack.c.l.b16 %v2270
      %v2839 = vunpack.c.l.b16 %v2271
      %v2840 = vunpack.c.l.b16 %v2272
      %v2841 = vunpack.c.l.b16 %v2273
      %v2842 = vunpack.c.l.b16 %v2274
      %v2843 = vunpack.c.l.b16 %v2275
      %v2844 = vunpack.c.l.b16 %v2276
      %v2845 = vunpack.c.l.b16 %v2277
      %v2846 = vunpack.c.l.b16 %v2278
      %v2847 = vunpack.c.l.b16 %v2279
      %v2848 = vunpack.c.l.b16 %v2280
      %v2849 = vunpack.c.l.b16 %v2281
      %v2850 = vunpack.c.l.b16 %v2282
      %v2851 = vunpack.c.l.b16 %v2283
      %v2852 = vunpack.c.l.b16 %v2284
      %v2853 = vunpack.c.l.b16 %v2285
      %v2854 = vunpack.c.l.b16 %v2286
      %v2855 = vunpack.c.l.b16 %v2287
      %v2856 = vunpack.c.l.b16 %v2288
      %v2857 = vunpack.c.l.b16 %v2289
      %v2858 = vunpack.c.l.b16 %v2290
      %v2859 = vunpack.c.l.b16 %v2291
      %v2860 = vunpack.c.l.b16 %v2292
      %v2861 = vunpack.c.l.b16 %v2293
      %v2862 = vpack.c.b16 %v2607, %v2606
      %v2863 = vpack.c.b16 %v2609, %v2608
      %v2864 = vpack.c.b16 %v2611, %v2610
      %v2865 = vpack.c.b16 %v2613, %v2612
      %v2866 = vpack.c.b16 %v2615, %v2614
      %v2867 = vpack.c.b16 %v2617, %v2616
      %v2868 = vpack.c.b16 %v2619, %v2618
      %v2869 = vpack.c.b16 %v2621, %v2620
      %v2870 = vpack.c.b16 %v2623, %v2622
      %v2871 = vpack.c.b16 %v2625, %v2624
      %v2872 = vpack.c.b16 %v2627, %v2626
      %v2873 = vpack.c.b16 %v2629, %v2628
      %v2874 = vpack.c.b16 %v2631, %v2630
      %v2875 = vpack.c.b16 %v2633, %v2632
      %v2876 = vpack.c.b16 %v2635, %v2634
      %v2877 = vpack.c.b16 %v2637, %v2636
      %v2878 = vpack.c.b16 %v2639, %v2638
      %v2879 = vpack.c.b16 %v2641, %v2640
      %v2880 = vpack.c.b16 %v2643, %v2642
      %v2881 = vpack.c.b16 %v2645, %v2644
      %v2882 = vpack.c.b16 %v2647, %v2646
      %v2883 = vpack.c.b16 %v2649, %v2648
      %v2884 = vpack.c.b16 %v2651, %v2650
      %v2885 = vpack.c.b16 %v2653, %v2652
      %v2886 = vpack.c.b16 %v2655, %v2654
      %v2887 = vpack.c.b16 %v2657, %v2656
      %v2888 = vpack.c.b16 %v2659, %v2658
      %v2889 = vpack.c.b16 %v2661, %v2660
      %v2890 = vpack.c.b16 %v2663, %v2662
      %v2891 = vpack.c.b16 %v2665, %v2664
      %v2892 = vpack.c.b16 %v2667, %v2666
      %v2893 = vpack.c.b16 %v2669, %v2668
      %v2894 = vpack.c.b16 %v2671, %v2670
      %v2895 = vpack.c.b16 %v2673, %v2672
      %v2896 = vpack.c.b16 %v2675, %v2674
      %v2897 = vpack.c.b16 %v2677, %v2676
      %v2898 = vpack.c.b16 %v2679, %v2678
      %v2899 = vpack.c.b16 %v2681, %v2680
      %v2900 = vpack.c.b16 %v2683, %v2682
      %v2901 = vpack.c.b16 %v2685, %v2684
      %v2902 = vpack.c.b16 %v2687, %v2686
      %v2903 = vpack.c.b16 %v2689, %v2688
      %v2904 = vpack.c.b16 %v2691, %v2690
      %v2905 = vpack.c.b16 %v2693, %v2692
      %v2906 = vpack.c.b16 %v2695, %v2694
      %v2907 = vpack.c.b16 %v2697, %v2696
      %v2908 = vpack.c.b16 %v2699, %v2698
      %v2909 = vpack.c.b16 %v2701, %v2700
      %v2910 = vpack.c.b16 %v2703, %v2702
      %v2911 = vpack.c.b16 %v2705, %v2704
      %v2912 = vpack.c.b16 %v2707, %v2706
      %v2913 = vpack.c.b16 %v2709, %v2708
      %v2914 = vpack.c.b16 %v2711, %v2710
      %v2915 = vpack.c.b16 %v2713, %v2712
      %v2916 = vpack.c.b16 %v2715, %v2714
      %v2917 = vpack.c.b16 %v2717, %v2716
      %v2918 = vpack.c.b16 %v2719, %v2718
      %v2919 = vpack.c.b16 %v2721, %v2720
      %v2920 = vpack.c.b16 %v2723, %v2722
      %v2921 = vpack.c.b16 %v2725, %v2724
      %v2922 = vpack.c.b16 %v2727, %v2726
      %v2923 = vpack.c.b16 %v2729, %v2728
      %v2924 = vpack.c.b16 %v2731, %v2730
      %v2925 = vpack.c.b16 %v2733, %v2732
      %v2926 = vpack.c.b16 %v2735, %v2734
      %v2927 = vpack.c.b16 %v2737, %v2736
      %v2928 = vpack.c.b16 %v2739, %v2738
      %v2929 = vpack.c.b16 %v2741, %v2740
      %v2930 = vpack.c.b16 %v2743, %v2742
      %v2931 = vpack.c.b16 %v2745, %v2744
      %v2932 = vpack.c.b16 %v2747, %v2746
      %v2933 = vpack.c.b16 %v2749, %v2748
      %v2934 = vpack.c.b16 %v2751, %v2750
      %v2935 = vpack.c.b16 %v2753, %v2752
      %v2936 = vpack.c.b16 %v2755, %v2754
      %v2937 = vpack.c.b16 %v2757, %v2756
      %v2938 = vpack.c.b16 %v2759, %v2758
      %v2939 = vpack.c.b16 %v2761, %v2760
      %v2940 = vpack.c.b16 %v2763, %v2762
      %v2941 = vpack.c.b16 %v2765, %v2764
      %v2942 = vpack.c.b16 %v2767, %v2766
      %v2943 = vpack.c.b16 %v2769, %v2768
      %v2944 = vpack.c.b16 %v2771, %v2770
      %v2945 = vpack.c.b16 %v2773, %v2772
      %v2946 = vpack.c.b16 %v2775, %v2774
      %v2947 = vpack.c.b16 %v2777, %v2776
      %v2948 = vpack.c.b16 %v2779, %v2778
      %v2949 = vpack.c.b16 %v2781, %v2780
      %v2950 = vpack.c.b16 %v2783, %v2782
      %v2951 = vpack.c.b16 %v2785, %v2784
      %v2952 = vpack.c.b16 %v2787, %v2786
      %v2953 = vpack.c.b16 %v2789, %v2788
      %v2954 = vpack.c.b16 %v2791, %v2790
      %v2955 = vpack.c.b16 %v2793, %v2792
      %v2956 = vpack.c.b16 %v2795, %v2794
      %v2957 = vpack.c.b16 %v2797, %v2796
      %v2958 = vpack.c.b16 %v2799, %v2798
      %v2959 = vpack.c.b16 %v2801, %v2800
      %v2960 = vpack.c.b16 %v2803, %v2802
      %v2961 = vpack.c.b16 %v2805, %v2804
      %v2962 = vpack.c.b16 %v2807, %v2806
      %v2963 = vpack.c.b16 %v2809, %v2808
      %v2964 = vpack.c.b16 %v2811, %v2810
      %v2965 = vpack.c.b16 %v2813, %v2812
      %v2966 = vpack.c.b16 %v2815, %v2814
      %v2967 = vpack.c.b16 %v2817, %v2816
      %v2968 = vpack.c.b16 %v2819, %v2818
      %v2969 = vpack.c.b16 %v2821, %v2820
      %v2970 = vpack.c.b16 %v2823, %v2822
      %v2971 = vpack.c.b16 %v2825, %v2824
      %v2972 = vpack.c.b16 %v2827, %v2826
      %v2973 = vpack.c.b16 %v2829, %v2828
      %v2974 = vpack.c.b16 %v2831, %v2830
      %v2975 = vpack.c.b16 %v2833, %v2832
      %v2976 = vpack.c.b16 %v2835, %v2834
      %v2977 = vpack.c.b16 %v2837, %v2836
      %v2978 = vpack.c.b16 %v2839, %v2838
      %v2979 = vpack.c.b16 %v2841, %v2840
      %v2980 = vpack.c.b16 %v2843, %v2842
      %v2981 = vpack.c.b16 %v2845, %v2844
      %v2982 = vpack.c.b16 %v2847, %v2846
      %v2983 = vpack.c.b16 %v2849, %v2848
      %v2984 = vpack.c.b16 %v2851, %v2850
      %v2985 = vpack.c.b16 %v2853, %v2852
      %v2986 = vpack.c.b16 %v2855, %v2854
      %v2987 = vpack.c.b16 %v2857, %v2856
      %v2988 = vpack.c.b16 %v2859, %v2858
      %v2989 = vpack.c.b16 %v2861, %v2860
      %3118 = vmatpush.bf16.msra.mxu0 %v2869
      %3119 = vmatpush.bf16.msra.mxu0 %v2868
      %3120 = vmatpush.bf16.msra.mxu0 %v2867
      %3121 = vmatpush.bf16.msra.mxu0 %v2866
      %3122 = vmatpush.bf16.msra.mxu0 %v2865
      %3123 = vmatpush.bf16.msra.mxu0 %v2864
      %3124 = vmatpush.bf16.msra.mxu0 %v2863
      %3125 = vmatpush.bf16.msra.mxu0 %v2862
      %3126 = vmatmul.bf16.gmra.mxu0 %v2318
      %v3127 = vpop.f32.mrf.mxu0
      %v3128 = vadd.f32 0.0, %v3127
      %v3129 = vpop.f32.mrf.mxu0
      %3130 = vdwg.mxu0
      %3131 = vmatpush.bf16.msra.mxu0 %v2877
      %3132 = vmatpush.bf16.msra.mxu0 %v2876
      %3133 = vmatpush.bf16.msra.mxu0 %v2875
      %3134 = vmatpush.bf16.msra.mxu0 %v2874
      %3135 = vmatpush.bf16.msra.mxu0 %v2873
      %3136 = vmatpush.bf16.msra.mxu0 %v2872
      %3137 = vmatpush.bf16.msra.mxu0 %v2871
      %3138 = vmatpush.bf16.msra.mxu0 %v2870
      %3139 = vmatmul.bf16.gmra.mxu0 %v2319
      %v3140 = vpop.f32.mrf.mxu0
      %v3141 = vadd.f32 %v3128, %v3140
      %v3142 = vpop.f32.mrf.mxu0
      %3143 = vdwg.mxu0
      %3144 = vmatpush.bf16.msra.mxu0 %v2885
      %3145 = vmatpush.bf16.msra.mxu0 %v2884
      %3146 = vmatpush.bf16.msra.mxu0 %v2883
      %3147 = vmatpush.bf16.msra.mxu0 %v2882
      %3148 = vmatpush.bf16.msra.mxu0 %v2881
      %3149 = vmatpush.bf16.msra.mxu0 %v2880
      %3150 = vmatpush.bf16.msra.mxu0 %v2879
      %3151 = vmatpush.bf16.msra.mxu0 %v2878
      %3152 = vmatmul.bf16.gmra.mxu0 %v2320
      %v3153 = vpop.f32.mrf.mxu0
      %v3154 = vadd.f32 %v3141, %v3153
      %v3155 = vpop.f32.mrf.mxu0
      %3156 = vdwg.mxu0
      %3157 = vmatpush.bf16.msra.mxu0 %v2893
      %3158 = vmatpush.bf16.msra.mxu0 %v2892
      %3159 = vmatpush.bf16.msra.mxu0 %v2891
      %3160 = vmatpush.bf16.msra.mxu0 %v2890
      %3161 = vmatpush.bf16.msra.mxu0 %v2889
      %3162 = vmatpush.bf16.msra.mxu0 %v2888
      %3163 = vmatpush.bf16.msra.mxu0 %v2887
      %3164 = vmatpush.bf16.msra.mxu0 %v2886
      %3165 = vmatmul.bf16.gmra.mxu0 %v2321
      %v3166 = vpop.f32.mrf.mxu0
      %v3167 = vadd.f32 %v3154, %v3166
      %v3168 = vpop.f32.mrf.mxu0
      %3169 = vdwg.mxu0
      %3170 = vmatpush.bf16.msra.mxu0 %v2901
      %3171 = vmatpush.bf16.msra.mxu0 %v2900
      %3172 = vmatpush.bf16.msra.mxu0 %v2899
      %3173 = vmatpush.bf16.msra.mxu0 %v2898
      %3174 = vmatpush.bf16.msra.mxu0 %v2897
      %3175 = vmatpush.bf16.msra.mxu0 %v2896
      %3176 = vmatpush.bf16.msra.mxu0 %v2895
      %3177 = vmatpush.bf16.msra.mxu0 %v2894
      %3178 = vmatmul.bf16.gmra.mxu0 %v2322
      %v3179 = vpop.f32.mrf.mxu0
      %v3180 = vadd.f32 %v3167, %v3179
      %v3181 = vpop.f32.mrf.mxu0
      %3182 = vdwg.mxu0
      %3183 = vmatpush.bf16.msra.mxu0 %v2909
      %3184 = vmatpush.bf16.msra.mxu0 %v2908
      %3185 = vmatpush.bf16.msra.mxu0 %v2907
      %3186 = vmatpush.bf16.msra.mxu0 %v2906
      %3187 = vmatpush.bf16.msra.mxu0 %v2905
      %3188 = vmatpush.bf16.msra.mxu0 %v2904
      %3189 = vmatpush.bf16.msra.mxu0 %v2903
      %3190 = vmatpush.bf16.msra.mxu0 %v2902
      %3191 = vmatmul.bf16.gmra.mxu0 %v2323
      %v3192 = vpop.f32.mrf.mxu0
      %v3193 = vadd.f32 %v3180, %v3192
      %v3194 = vpop.f32.mrf.mxu0
      %3195 = vdwg.mxu0
      %3196 = vmatpush.bf16.msra.mxu0 %v2917
      %3197 = vmatpush.bf16.msra.mxu0 %v2916
      %3198 = vmatpush.bf16.msra.mxu0 %v2915
      %3199 = vmatpush.bf16.msra.mxu0 %v2914
      %3200 = vmatpush.bf16.msra.mxu0 %v2913
      %3201 = vmatpush.bf16.msra.mxu0 %v2912
      %3202 = vmatpush.bf16.msra.mxu0 %v2911
      %3203 = vmatpush.bf16.msra.mxu0 %v2910
      %3204 = vmatmul.bf16.gmra.mxu0 %v2324
      %v3205 = vpop.f32.mrf.mxu0
      %v3206 = vadd.f32 %v3193, %v3205
      %v3207 = vpop.f32.mrf.mxu0
      %3208 = vdwg.mxu0
      %3209 = vmatpush.bf16.msra.mxu0 %v2925
      %3210 = vmatpush.bf16.msra.mxu0 %v2924
      %3211 = vmatpush.bf16.msra.mxu0 %v2923
      %3212 = vmatpush.bf16.msra.mxu0 %v2922
      %3213 = vmatpush.bf16.msra.mxu0 %v2921
      %3214 = vmatpush.bf16.msra.mxu0 %v2920
      %3215 = vmatpush.bf16.msra.mxu0 %v2919
      %3216 = vmatpush.bf16.msra.mxu0 %v2918
      %3217 = vmatmul.bf16.gmra.mxu0 %v2325
      %v3218 = vpop.f32.mrf.mxu0
      %v3219 = vadd.f32 %v3206, %v3218
      %v3220 = vpop.f32.mrf.mxu0
      %3221 = vdwg.mxu0
      %3222 = vmatpush.bf16.msra.mxu0 %v2933
      %3223 = vmatpush.bf16.msra.mxu0 %v2932
      %3224 = vmatpush.bf16.msra.mxu0 %v2931
      %3225 = vmatpush.bf16.msra.mxu0 %v2930
      %3226 = vmatpush.bf16.msra.mxu0 %v2929
      %3227 = vmatpush.bf16.msra.mxu0 %v2928
      %3228 = vmatpush.bf16.msra.mxu0 %v2927
      %3229 = vmatpush.bf16.msra.mxu0 %v2926
      %3230 = vmatmul.bf16.gmra.mxu0 %v2326
      %v3231 = vpop.f32.mrf.mxu0
      %v3232 = vadd.f32 %v3219, %v3231
      %v3233 = vpop.f32.mrf.mxu0
      %3234 = vdwg.mxu0
      %3235 = vmatpush.bf16.msra.mxu0 %v2941
      %3236 = vmatpush.bf16.msra.mxu0 %v2940
      %3237 = vmatpush.bf16.msra.mxu0 %v2939
      %3238 = vmatpush.bf16.msra.mxu0 %v2938
      %3239 = vmatpush.bf16.msra.mxu0 %v2937
      %3240 = vmatpush.bf16.msra.mxu0 %v2936
      %3241 = vmatpush.bf16.msra.mxu0 %v2935
      %3242 = vmatpush.bf16.msra.mxu0 %v2934
      %3243 = vmatmul.bf16.gmra.mxu0 %v2327
      %v3244 = vpop.f32.mrf.mxu0
      %v3245 = vadd.f32 %v3232, %v3244
      %v3246 = vpop.f32.mrf.mxu0
      %3247 = vdwg.mxu0
      %3248 = vmatpush.bf16.msra.mxu0 %v2949
      %3249 = vmatpush.bf16.msra.mxu0 %v2948
      %3250 = vmatpush.bf16.msra.mxu0 %v2947
      %3251 = vmatpush.bf16.msra.mxu0 %v2946
      %3252 = vmatpush.bf16.msra.mxu0 %v2945
      %3253 = vmatpush.bf16.msra.mxu0 %v2944
      %3254 = vmatpush.bf16.msra.mxu0 %v2943
      %3255 = vmatpush.bf16.msra.mxu0 %v2942
      %3256 = vmatmul.bf16.gmra.mxu0 %v2328
      %v3257 = vpop.f32.mrf.mxu0
      %v3258 = vadd.f32 %v3245, %v3257
      %v3259 = vpop.f32.mrf.mxu0
      %3260 = vdwg.mxu0
      %3261 = vmatpush.bf16.msra.mxu0 %v2957
      %3262 = vmatpush.bf16.msra.mxu0 %v2956
      %3263 = vmatpush.bf16.msra.mxu0 %v2955
      %3264 = vmatpush.bf16.msra.mxu0 %v2954
      %3265 = vmatpush.bf16.msra.mxu0 %v2953
      %3266 = vmatpush.bf16.msra.mxu0 %v2952
      %3267 = vmatpush.bf16.msra.mxu0 %v2951
      %3268 = vmatpush.bf16.msra.mxu0 %v2950
      %3269 = vmatmul.bf16.gmra.mxu0 %v2329
      %v3270 = vpop.f32.mrf.mxu0
      %v3271 = vadd.f32 %v3258, %v3270
      %v3272 = vpop.f32.mrf.mxu0
      %3273 = vdwg.mxu0
      %3274 = vmatpush.bf16.msra.mxu0 %v2965
      %3275 = vmatpush.bf16.msra.mxu0 %v2964
      %3276 = vmatpush.bf16.msra.mxu0 %v2963
      %3277 = vmatpush.bf16.msra.mxu0 %v2962
      %3278 = vmatpush.bf16.msra.mxu0 %v2961
      %3279 = vmatpush.bf16.msra.mxu0 %v2960
      %3280 = vmatpush.bf16.msra.mxu0 %v2959
      %3281 = vmatpush.bf16.msra.mxu0 %v2958
      %3282 = vmatmul.bf16.gmra.mxu0 %v2330
      %v3283 = vpop.f32.mrf.mxu0
      %v3284 = vadd.f32 %v3271, %v3283
      %v3285 = vpop.f32.mrf.mxu0
      %3286 = vdwg.mxu0
      %3287 = vmatpush.bf16.msra.mxu0 %v2973
      %3288 = vmatpush.bf16.msra.mxu0 %v2972
      %3289 = vmatpush.bf16.msra.mxu0 %v2971
      %3290 = vmatpush.bf16.msra.mxu0 %v2970
      %3291 = vmatpush.bf16.msra.mxu0 %v2969
      %3292 = vmatpush.bf16.msra.mxu0 %v2968
      %3293 = vmatpush.bf16.msra.mxu0 %v2967
      %3294 = vmatpush.bf16.msra.mxu0 %v2966
      %3295 = vmatmul.bf16.gmra.mxu0 %v2331
      %v3296 = vpop.f32.mrf.mxu0
      %v3297 = vadd.f32 %v3284, %v3296
      %v3298 = vpop.f32.mrf.mxu0
      %3299 = vdwg.mxu0
      %3300 = vmatpush.bf16.msra.mxu0 %v2981
      %3301 = vmatpush.bf16.msra.mxu0 %v2980
      %3302 = vmatpush.bf16.msra.mxu0 %v2979
      %3303 = vmatpush.bf16.msra.mxu0 %v2978
      %3304 = vmatpush.bf16.msra.mxu0 %v2977
      %3305 = vmatpush.bf16.msra.mxu0 %v2976
      %3306 = vmatpush.bf16.msra.mxu0 %v2975
      %3307 = vmatpush.bf16.msra.mxu0 %v2974
      %3308 = vmatmul.bf16.gmra.mxu0 %v2332
      %v3309 = vpop.f32.mrf.mxu0
      %v3310 = vadd.f32 %v3297, %v3309
      %v3311 = vpop.f32.mrf.mxu0
      %3312 = vdwg.mxu0
      %3313 = vmatpush.bf16.msra.mxu0 %v2989
      %3314 = vmatpush.bf16.msra.mxu0 %v2988
      %3315 = vmatpush.bf16.msra.mxu0 %v2987
      %3316 = vmatpush.bf16.msra.mxu0 %v2986
      %3317 = vmatpush.bf16.msra.mxu0 %v2985
      %3318 = vmatpush.bf16.msra.mxu0 %v2984
      %3319 = vmatpush.bf16.msra.mxu0 %v2983
      %3320 = vmatpush.bf16.msra.mxu0 %v2982
      %3321 = vmatmul.bf16.gmra.mxu0 %v2333
      %v3322 = vpop.f32.mrf.mxu0
      %v3323 = vadd.f32 %v3310, %v3322
      %v3324 = vpop.f32.mrf.mxu0
      %3325 = vdwg.mxu0
      %v3326 = vadd.f32 %v2029, %v3323
      %vm3327 = vcmask 531456
      %3328 = vst.msk [vmem:[#allocation3] sm:$0xff] %vm3327, %v3326
      %p3329 = scmp.eq.s32.totalorder %s24, 3
      // Predicated region
      $region57: #{forward.1} parent=51 // pred_check
        %p3330 = pneg %p3329
      $region58: #{forward.1} parent=51 // pred_check_branch
        %3332 = sbr.rel (%p3330) target = $region60
      $region59: #{forward.1} parent=51 // pred_region
        %v3333 = vld [vmem:[#allocation3] sm:$0xff]
        %3335 = vset.pattern.permute.xlu0 0
        %3336 = vperm.xlu0 %3335, %v3333
        %v3337 = vpop.permute.xlu0 %3336
        %v3339 = vrcp.pop %v3337
        %v3340 = vmul.f32 %v3337, %v3339
        %v3341 = vsub.f32 1.0, %v3340
        %v3342 = vmul.f32 %v3339, %v3341
        %v3343 = vadd.f32 %v3339, %v3342
        %vm3344 = vweird.f32 %v3337
        %vm3345 = vweird.f32 %v3339
        %vm3346 = vmor %vm3344, %vm3345
        %v3347 = vsel %vm3346, %v3339, %v3343
        %v3348 = vand.u32 2147483647, %v3337
        %vm3349 = vcmp.eq.f32.partialorder %v3348, 8.507059e+37
        %v3350 = vand.u32 %v3337, 2147483648
        %v3351 = vor.u32 1.1754944e-38, %v3350
        %v3352 = vsel %vm3349, %v3351, %v3347
        %v3353 = vmul.f32 %v3333, %v3352
        %v3354 = vld [vmem:[#allocation2] sm:$0xff]
        %3356 = vrot.lane.b32.xlu0 %v3353, 63
        %v3357 = vpop.permute.xlu0 %3356
        %vm3359 = vcmask 523264
        %v3360 = vsel %vm3359, %v3354, %v3357
        %3361 = vst [vmem:[%s429 + $0x8] sm:$0xff] %v3360
      $region60: #{forward.1} parent=51 // pred_fallthru
        _
      %p3362 = scmp.lt.s32.totalorder %s23, 0
      %s3363 = scalar_select %p3362, %s23, 0
      %s3364 = smul.addr %s3363, 4
      %s3365 = smul.addr %s3364, 8
      %s3366 = scalar_lea.vmem %s8, %s3365
      // Predicated region
      $region61: #{forward.1} parent=51 // pred_check
        %p3367 = pneg %p249
      $region62: #{forward.1} parent=51 // pred_check_branch
        %3369 = sbr.rel (%p3367) target = $region64
      $region63: #{forward.1} parent=51 // pred_region
        _
      $region64: #{forward.1} parent=51 // pred_fallthru
        _
      // Predicated region
      $region65: #{forward.1} parent=51 // pred_check
        %p3370 = pneg %p249
      $region66: #{forward.1} parent=51 // pred_check_branch
        %3372 = sbr.rel (%p3370) target = $region68
      $region67: #{forward.1} parent=51 // pred_region
        %p3373 = scmp.lt.s32.totalorder %s23, 0
        %s3374 = scalar_select %p3373, %s23, 0
        %s3375 = smul.addr %s3374, 4
        %s3376 = smul.addr %s3375, 8
        %s3377 = scalar_lea.vmem %s8, %s3376
      $region68: #{forward.1} parent=51 // pred_fallthru
        _
    $region52: #{forward.1} parent=5 // pred_fallthru
      _
    %p3378 = scmp.le.s32.totalorder 2, %s14
    // Predicated region
    $region69: #{forward.1} parent=5 // pred_check
      %p3379 = pneg %p3378
    $region70: #{forward.1} parent=5 // pred_check_branch
      %3381 = sbr.rel (%p3379) target = $region72
    $region71: #{forward.1} parent=5 // pred_region
      %s3382 = ssub.s32 %s14, 2
    $region72: #{forward.1} parent=5 // pred_fallthru
      _
  $region6: #{forward.1} parent=0 // loop_footer
    %s18 = sadd.s32 1, %s14
  $region7: #{forward.1} parent=0 // loop_footer_branch
    %13 = sbr.rel target = $region3
  $region8: #{forward.1} parent=0 // loop_exit
    _

</llo_original>
